<compile_context>
chip_gen: v5e
topology: v5e:2x2
jax: 0.10.0
libtpu: 0.0.40
codegen_flags: <defaults>
</compile_context>

<pallas_src>
import functools

import jax
import jax.numpy as jnp
import numpy as np
from jax.experimental import pallas as pl
from jax.experimental.pallas import tpu as pltpu

K = 7           # conv kernel size
PAD = 3         # conv padding
CIN = 2         # [max, mean] stacked maps


def _round_up(x, m):
    return (x + m - 1) // m * m


def _sam_kernel(w_ref, mask_ref, x_ref, o_ref, ff_ref, *, C, H, W, CC, T, ML, MR):
    # w_ref   : SMEM (CIN*K*K,)        flattened conv weight (out channels = 1)
    # mask_ref: VMEM (K, H*W)          per-kw column-validity masks (0/1)
    # x_ref   : VMEM (1, C, H*W)       current batch element (lane-dense)
    # o_ref   : VMEM (1, C, H*W)
    # ff_ref  : VMEM (CIN, ML+H*W+MR)  zero-haloed flat [max, mean] maps
    f32 = jnp.float32
    HW = H * W
    WIDTH = ML + HW + MR
    nfull = C // CC
    crem = C - nfull * CC
    c_unroll = nfull if nfull <= 8 else 4

    # Static spatial tiles (all lane offsets static -> predictable lowering).
    tiles = []
    s0 = 0
    while s0 < HW:
        ts0 = min(T, HW - s0)
        tiles.append((s0, ts0))
        s0 += ts0

    # ---- 0) re-zero halos every grid step (tiny; megacore-safe) ------------
    ff_ref[:, 0:ML] = jnp.zeros((CIN, ML), f32)
    ff_ref[:, ML + HW:WIDTH] = jnp.zeros((CIN, MR), f32)

    # ---- 1) channel max / mean, spatial-tiled, elementwise accumulation ----
    for (s, ts) in tiles:
        first = x_ref[0, 0:CC, s:s + ts].astype(f32)            # (CC, ts)

        def _red(i, carry, s=s, ts=ts):
            mx, sm = carry
            c0 = pl.multiple_of(i * CC, CC)
            ch = x_ref[0, pl.ds(c0, CC), s:s + ts].astype(f32)  # pure VALU
            return jnp.maximum(mx, ch), sm + ch

        if nfull > 1:
            mx, sm = jax.lax.fori_loop(1, nfull, _red, (first, first),
                                       unroll=c_unroll)
        else:
            mx, sm = first, first

        # Collapse the sublane axis once per tile (XLU), not per chunk.
        mx_row = jnp.max(mx, axis=0, keepdims=True)              # (1, ts)
        sm_row = jnp.sum(sm, axis=0, keepdims=True)
        if crem:
            tail = x_ref[0, C - crem:C, s:s + ts].astype(f32)
            mx_row = jnp.maximum(mx_row, jnp.max(tail, axis=0, keepdims=True))
            sm_row = sm_row + jnp.sum(tail, axis=0, keepdims=True)

        ff_ref[0:1, ML + s:ML + s + ts] = mx_row
        ff_ref[1:2, ML + s:ML + s + ts] = sm_row * (1.0 / C)

    # ---- 2+3) 7x7 conv (2->1 ch, pad 3) + sigmoid + gating, per tile -------
    for (s, ts) in tiles:
        conv = jnp.zeros((1, ts), f32)
        for kw in range(K):
            acc = jnp.zeros((1, ts), f32)                        # single live acc
            for c in range(CIN):
                for kh in range(K):
                    off = ML + s + (kh - PAD) * W + (kw - PAD)   # static, >= 0
                    acc = acc + (ff_ref[c:c + 1, off:off + ts]
                                 * w_ref[c * K * K + kh * K + kw])
            conv = conv + acc * mask_ref[kw:kw + 1, s:s + ts]

        gate = jax.nn.sigmoid(conv)                              # (1, ts), EUP
        gate_cc = jnp.broadcast_to(gate, (CC, ts))               # once per tile

        def _gate(i, carry, s=s, ts=ts, gate_cc=gate_cc):
            c0 = pl.multiple_of(i * CC, CC)
            xc = x_ref[0, pl.ds(c0, CC), s:s + ts].astype(f32)
            o_ref[0, pl.ds(c0, CC), s:s + ts] = (xc * gate_cc).astype(o_ref.dtype)
            return carry

        jax.lax.fori_loop(0, nfull, _gate, 0, unroll=c_unroll)
        if crem:
            xc = x_ref[0, C - crem:C, s:s + ts].astype(f32)
            o_ref[0, C - crem:C, s:s + ts] = (
                xc * jnp.broadcast_to(gate, (crem, ts))).astype(o_ref.dtype)


def _column_masks(H, W):
    """mask[kw, p] = 1 iff column (p % W) + (kw - PAD) lies inside [0, W)."""
    col = np.tile(np.arange(W, dtype=np.int64), H)
    m = np.zeros((K, H * W), np.float32)
    for kw in range(K):
        dw = kw - PAD
        m[kw] = ((col + dw >= 0) & (col + dw < W)).astype(np.float32)
    return jnp.asarray(m)


def sam_forward(x, conv_weight):
    """x: (N, C, H, W); conv_weight: (1, CIN, K, K). sigmoid(conv([max,mean])) * x."""
    N, C, H, W = x.shape
    HW = H * W
    itemsize = jnp.dtype(x.dtype).itemsize
    packing = max(1, 4 // itemsize)
    CC = min(C, 8 * packing)               # channel chunk fills packed sublanes
    T = min(HW, 512)                        # spatial (lane) tile -> no vreg spills
    ML = _round_up(PAD * W + PAD, 128)      # aligned left halo for the flat maps
    MR = PAD * W + PAD
    WIDTH = ML + HW + MR

    x_flat = x.reshape(N, C, HW)            # lane-dense last dim
    w_flat = conv_weight.astype(jnp.float32).reshape(-1)
    masks = _column_masks(H, W)

    # VMEM budget: double-buffered in/out x blocks + masks + haloed-map scratch.
    vmem_needed = (4 * C * HW * itemsize + 2 * K * HW * 4
                   + CIN * WIDTH * 4 + (2 << 20))
    try:
        cap = int(pltpu.get_tpu_info().vmem_capacity_bytes)
    except Exception:
        cap = 64 << 20                       # conservative (v7x-sized) fallback
    vmem_limit = int(min(cap * 7 // 8, max(vmem_needed, 32 << 20)))

    kernel = functools.partial(_sam_kernel, C=C, H=H, W=W, CC=CC, T=T, ML=ML, MR=MR)
    out_flat = pl.pallas_call(
        kernel,
        out_shape=jax.ShapeDtypeStruct((N, C, HW), x.dtype),
        grid_spec=pltpu.PrefetchScalarGridSpec(
            num_scalar_prefetch=0,
            grid=(N,),
            in_specs=[
                pl.BlockSpec(memory_space=pltpu.MemorySpace.SMEM),   # conv weights
                pl.BlockSpec((K, HW), lambda b: (0, 0)),             # column masks
                pl.BlockSpec((1, C, HW), lambda b: (b, 0, 0)),       # x
            ],
            out_specs=pl.BlockSpec((1, C, HW), lambda b: (b, 0, 0)),
            scratch_shapes=[
                pltpu.VMEM((CIN, WIDTH), jnp.float32),               # haloed maps
            ],
        ),
        compiler_params=pltpu.CompilerParams(
            dimension_semantics=("parallel",),
            vmem_limit_bytes=vmem_limit,
        ),
    )(w_flat, masks, x_flat)
    return out_flat.reshape(N, C, H, W)


def sam_reference(x, conv_weight):
    """Pure-JAX reference mirroring the PyTorch forward."""
    mx = jnp.max(x, axis=1, keepdims=True)
    av = jnp.mean(x, axis=1, keepdims=True)
    concat = jnp.concatenate([mx, av], axis=1)              # (N, 2, H, W)
    out = jax.lax.conv_general_dilated(
        concat, conv_weight,
        window_strides=(1, 1), padding=[(PAD, PAD), (PAD, PAD)],
        dimension_numbers=("NCHW", "OIHW", "NCHW"),
    )                                                        # (N, 1, H, W)
    return jax.nn.sigmoid(out) * x


if __name__ == "__main__":
    key = jax.random.PRNGKey(0)
    kx, kw = jax.random.split(key)

    N, C, H, W = 2, 4, 16, 16
    x = jax.random.normal(kx, (N, C, H, W), dtype=jnp.float32)
    # Deterministic conv weight init (shape matches nn.Conv2d(2, 1, 7), bias=False).
    fan_in = CIN * K * K
    conv_weight = jax.random.uniform(
        kw, (1, CIN, K, K), dtype=jnp.float32,
        minval=-1.0 / np.sqrt(fan_in), maxval=1.0 / np.sqrt(fan_in))

    out = sam_forward(x, conv_weight)
    out = jax.block_until_ready(out)

    ref = sam_reference(x, conv_weight)
    np.testing.assert_allclose(np.asarray(out), np.asarray(ref),
                               rtol=1e-5, atol=1e-5)
    print("KERNEL_OK")
</pallas_src>

<mosaic_0001>
module attributes {stable_mosaic.version = 11 : i64} {
  func.func @_sam_kernel(%arg0: i32, %arg1: memref<98xf32, #tpu.memory_space<smem>>, %arg2: memref<7x256xf32, #tpu.memory_space<vmem>>, %arg3: memref<1x4x256xf32, #tpu.memory_space<vmem>>, %arg4: memref<1x4x256xf32, #tpu.memory_space<vmem>>, %arg5: memref<2x435xf32, #tpu.memory_space<vmem>>) attributes {dimension_semantics = [#tpu.dimension_semantics<parallel>], iteration_bounds = array<i64: 2>, scalar_prefetch = 0 : i64, scratch_operands = 1 : i64, tpu.core_type = #tpu.core_type<tc>, window_params = [{transform_indices = @transform_0, window_bounds = array<i64: 98>}, {pipeline_mode = #tpu.pipeline_mode<synchronous>, transform_indices = @transform_1, window_bounds = array<i64: 7, 256>}, {transform_indices = @transform_2, window_bounds = array<i64: 1, 4, 256>}, {transform_indices = @transform_3, window_bounds = array<i64: 1, 4, 256>}]} {
    %cst = arith.constant 0.000000e+00 : f32
    %0 = vector.broadcast %cst : f32 to vector<2x128xf32>
    %c0 = arith.constant 0 : index
    %c0_0 = arith.constant 0 : index
    %1 = vector.load %arg5[%c0, %c0_0] : memref<2x435xf32, #tpu.memory_space<vmem>>, vector<2x128xf32>
    tpu.vector_store %arg5[%c0, %c0_0], %0 {strides = array<i32>} : memref<2x435xf32, #tpu.memory_space<vmem>>, vector<2x128xf32>,
    %cst_1 = arith.constant 0.000000e+00 : f32
    %2 = vector.broadcast %cst_1 : f32 to vector<2x51xf32>
    %c0_2 = arith.constant 0 : index
    %c384 = arith.constant 384 : index
    %3 = vector.load %arg5[%c0_2, %c384] : memref<2x435xf32, #tpu.memory_space<vmem>>, vector<2x51xf32>
    tpu.vector_store %arg5[%c0_2, %c384], %2 {strides = array<i32>} : memref<2x435xf32, #tpu.memory_space<vmem>>, vector<2x51xf32>,
    %c0_3 = arith.constant 0 : index
    %c0_4 = arith.constant 0 : index
    %c0_5 = arith.constant 0 : index
    %4 = vector.load %arg3[%c0_3, %c0_4, %c0_5] : memref<1x4x256xf32, #tpu.memory_space<vmem>>, vector<1x4x256xf32>
    %5 = vector.shape_cast %4 : vector<1x4x256xf32> to vector<4x256xf32>
    %cst_6 = arith.constant dense<0xFF800000> : vector<256xf32>
    %6 = vector.multi_reduction <maximumf>, %5, %cst_6 [0] : vector<4x256xf32> to vector<256xf32>
    %7 = vector.shape_cast %6 : vector<256xf32> to vector<1x256xf32>
    %cst_7 = arith.constant dense<0.000000e+00> : vector<256xf32>
    %8 = vector.multi_reduction <add>, %5, %cst_7 [0] : vector<4x256xf32> to vector<256xf32>
    %9 = vector.shape_cast %8 : vector<256xf32> to vector<1x256xf32>
    %c0_8 = arith.constant 0 : index
    %c128 = arith.constant 128 : index
    %10 = vector.load %arg5[%c0_8, %c128] : memref<2x435xf32, #tpu.memory_space<vmem>>, vector<1x256xf32>
    tpu.vector_store %arg5[%c0_8, %c128], %7 {strides = array<i32>} : memref<2x435xf32, #tpu.memory_space<vmem>>, vector<1x256xf32>,
    %cst_9 = arith.constant 2.500000e-01 : f32
    %11 = vector.broadcast %cst_9 : f32 to vector<1x256xf32>
    %12 = arith.mulf %9, %11 : vector<1x256xf32>
    %c1 = arith.constant 1 : index
    %c128_10 = arith.constant 128 : index
    %13 = vector.load %arg5[%c1, %c128_10] : memref<2x435xf32, #tpu.memory_space<vmem>>, vector<1x256xf32>
    tpu.vector_store %arg5[%c1, %c128_10], %12 {strides = array<i32>} : memref<2x435xf32, #tpu.memory_space<vmem>>, vector<1x256xf32>,
    %cst_11 = arith.constant 0.000000e+00 : f32
    %14 = vector.broadcast %cst_11 : f32 to vector<1x256xf32>
    %cst_12 = arith.constant 0.000000e+00 : f32
    %15 = vector.broadcast %cst_12 : f32 to vector<1x256xf32>
    %c0_13 = arith.constant 0 : index
    %c77 = arith.constant 77 : index
    %16 = vector.load %arg5[%c0_13, %c77] : memref<2x435xf32, #tpu.memory_space<vmem>>, vector<1x256xf32>
    %c0_14 = arith.constant 0 : index
    %17 = memref.load %arg1[%c0_14] : memref<98xf32, #tpu.memory_space<smem>>
    %18 = vector.broadcast %17 : f32 to vector<1x256xf32>
    %19 = arith.mulf %16, %18 : vector<1x256xf32>
    %20 = arith.addf %15, %19 : vector<1x256xf32>
    %c0_15 = arith.constant 0 : index
    %c93 = arith.constant 93 : index
    %21 = vector.load %arg5[%c0_15, %c93] : memref<2x435xf32, #tpu.memory_space<vmem>>, vector<1x256xf32>
    %c7 = arith.constant 7 : index
    %22 = memref.load %arg1[%c7] : memref<98xf32, #tpu.memory_space<smem>>
    %23 = vector.broadcast %22 : f32 to vector<1x256xf32>
    %24 = arith.mulf %21, %23 : vector<1x256xf32>
    %25 = arith.addf %20, %24 : vector<1x256xf32>
    %c0_16 = arith.constant 0 : index
    %c109 = arith.constant 109 : index
    %26 = vector.load %arg5[%c0_16, %c109] : memref<2x435xf32, #tpu.memory_space<vmem>>, vector<1x256xf32>
    %c14 = arith.constant 14 : index
    %27 = memref.load %arg1[%c14] : memref<98xf32, #tpu.memory_space<smem>>
    %28 = vector.broadcast %27 : f32 to vector<1x256xf32>
    %29 = arith.mulf %26, %28 : vector<1x256xf32>
    %30 = arith.addf %25, %29 : vector<1x256xf32>
    %c0_17 = arith.constant 0 : index
    %c125 = arith.constant 125 : index
    %31 = vector.load %arg5[%c0_17, %c125] : memref<2x435xf32, #tpu.memory_space<vmem>>, vector<1x256xf32>
    %c21 = arith.constant 21 : index
    %32 = memref.load %arg1[%c21] : memref<98xf32, #tpu.memory_space<smem>>
    %33 = vector.broadcast %32 : f32 to vector<1x256xf32>
    %34 = arith.mulf %31, %33 : vector<1x256xf32>
    %35 = arith.addf %30, %34 : vector<1x256xf32>
    %c0_18 = arith.constant 0 : index
    %c141 = arith.constant 141 : index
    %36 = vector.load %arg5[%c0_18, %c141] : memref<2x435xf32, #tpu.memory_space<vmem>>, vector<1x256xf32>
    %c28 = arith.constant 28 : index
    %37 = memref.load %arg1[%c28] : memref<98xf32, #tpu.memory_space<smem>>
    %38 = vector.broadcast %37 : f32 to vector<1x256xf32>
    %39 = arith.mulf %36, %38 : vector<1x256xf32>
    %40 = arith.addf %35, %39 : vector<1x256xf32>
    %c0_19 = arith.constant 0 : index
    %c157 = arith.constant 157 : index
    %41 = vector.load %arg5[%c0_19, %c157] : memref<2x435xf32, #tpu.memory_space<vmem>>, vector<1x256xf32>
    %c35 = arith.constant 35 : index
    %42 = memref.load %arg1[%c35] : memref<98xf32, #tpu.memory_space<smem>>
    %43 = vector.broadcast %42 : f32 to vector<1x256xf32>
    %44 = arith.mulf %41, %43 : vector<1x256xf32>
    %45 = arith.addf %40, %44 : vector<1x256xf32>
    %c0_20 = arith.constant 0 : index
    %c173 = arith.constant 173 : index
    %46 = vector.load %arg5[%c0_20, %c173] : memref<2x435xf32, #tpu.memory_space<vmem>>, vector<1x256xf32>
    %c42 = arith.constant 42 : index
    %47 = memref.load %arg1[%c42] : memref<98xf32, #tpu.memory_space<smem>>
    %48 = vector.broadcast %47 : f32 to vector<1x256xf32>
    %49 = arith.mulf %46, %48 : vector<1x256xf32>
    %50 = arith.addf %45, %49 : vector<1x256xf32>
    %c1_21 = arith.constant 1 : index
    %c77_22 = arith.constant 77 : index
    %51 = vector.load %arg5[%c1_21, %c77_22] : memref<2x435xf32, #tpu.memory_space<vmem>>, vector<1x256xf32>
    %c49 = arith.constant 49 : index
    %52 = memref.load %arg1[%c49] : memref<98xf32, #tpu.memory_space<smem>>
    %53 = vector.broadcast %52 : f32 to vector<1x256xf32>
    %54 = arith.mulf %51, %53 : vector<1x256xf32>
    %55 = arith.addf %50, %54 : vector<1x256xf32>
    %c1_23 = arith.constant 1 : index
    %c93_24 = arith.constant 93 : index
    %56 = vector.load %arg5[%c1_23, %c93_24] : memref<2x435xf32, #tpu.memory_space<vmem>>, vector<1x256xf32>
    %c56 = arith.constant 56 : index
    %57 = memref.load %arg1[%c56] : memref<98xf32, #tpu.memory_space<smem>>
    %58 = vector.broadcast %57 : f32 to vector<1x256xf32>
    %59 = arith.mulf %56, %58 : vector<1x256xf32>
    %60 = arith.addf %55, %59 : vector<1x256xf32>
    %c1_25 = arith.constant 1 : index
    %c109_26 = arith.constant 109 : index
    %61 = vector.load %arg5[%c1_25, %c109_26] : memref<2x435xf32, #tpu.memory_space<vmem>>, vector<1x256xf32>
    %c63 = arith.constant 63 : index
    %62 = memref.load %arg1[%c63] : memref<98xf32, #tpu.memory_space<smem>>
    %63 = vector.broadcast %62 : f32 to vector<1x256xf32>
    %64 = arith.mulf %61, %63 : vector<1x256xf32>
    %65 = arith.addf %60, %64 : vector<1x256xf32>
    %c1_27 = arith.constant 1 : index
    %c125_28 = arith.constant 125 : index
    %66 = vector.load %arg5[%c1_27, %c125_28] : memref<2x435xf32, #tpu.memory_space<vmem>>, vector<1x256xf32>
    %c70 = arith.constant 70 : index
    %67 = memref.load %arg1[%c70] : memref<98xf32, #tpu.memory_space<smem>>
    %68 = vector.broadcast %67 : f32 to vector<1x256xf32>
    %69 = arith.mulf %66, %68 : vector<1x256xf32>
    %70 = arith.addf %65, %69 : vector<1x256xf32>
    %c1_29 = arith.constant 1 : index
    %c141_30 = arith.constant 141 : index
    %71 = vector.load %arg5[%c1_29, %c141_30] : memref<2x435xf32, #tpu.memory_space<vmem>>, vector<1x256xf32>
    %c77_31 = arith.constant 77 : index
    %72 = memref.load %arg1[%c77_31] : memref<98xf32, #tpu.memory_space<smem>>
    %73 = vector.broadcast %72 : f32 to vector<1x256xf32>
    %74 = arith.mulf %71, %73 : vector<1x256xf32>
    %75 = arith.addf %70, %74 : vector<1x256xf32>
    %c1_32 = arith.constant 1 : index
    %c157_33 = arith.constant 157 : index
    %76 = vector.load %arg5[%c1_32, %c157_33] : memref<2x435xf32, #tpu.memory_space<vmem>>, vector<1x256xf32>
    %c84 = arith.constant 84 : index
    %77 = memref.load %arg1[%c84] : memref<98xf32, #tpu.memory_space<smem>>
    %78 = vector.broadcast %77 : f32 to vector<1x256xf32>
    %79 = arith.mulf %76, %78 : vector<1x256xf32>
    %80 = arith.addf %75, %79 : vector<1x256xf32>
    %c1_34 = arith.constant 1 : index
    %c173_35 = arith.constant 173 : index
    %81 = vector.load %arg5[%c1_34, %c173_35] : memref<2x435xf32, #tpu.memory_space<vmem>>, vector<1x256xf32>
    %c91 = arith.constant 91 : index
    %82 = memref.load %arg1[%c91] : memref<98xf32, #tpu.memory_space<smem>>
    %83 = vector.broadcast %82 : f32 to vector<1x256xf32>
    %84 = arith.mulf %81, %83 : vector<1x256xf32>
    %85 = arith.addf %80, %84 : vector<1x256xf32>
    %c0_36 = arith.constant 0 : index
    %c0_37 = arith.constant 0 : index
    %86 = vector.load %arg2[%c0_36, %c0_37] : memref<7x256xf32, #tpu.memory_space<vmem>>, vector<1x256xf32>
    %87 = arith.mulf %85, %86 : vector<1x256xf32>
    %88 = arith.addf %14, %87 : vector<1x256xf32>
    %cst_38 = arith.constant 0.000000e+00 : f32
    %89 = vector.broadcast %cst_38 : f32 to vector<1x256xf32>
    %c0_39 = arith.constant 0 : index
    %c78 = arith.constant 78 : index
    %90 = vector.load %arg5[%c0_39, %c78] : memref<2x435xf32, #tpu.memory_space<vmem>>, vector<1x256xf32>
    %c1_40 = arith.constant 1 : index
    %91 = memref.load %arg1[%c1_40] : memref<98xf32, #tpu.memory_space<smem>>
    %92 = vector.broadcast %91 : f32 to vector<1x256xf32>
    %93 = arith.mulf %90, %92 : vector<1x256xf32>
    %94 = arith.addf %89, %93 : vector<1x256xf32>
    %c0_41 = arith.constant 0 : index
    %c94 = arith.constant 94 : index
    %95 = vector.load %arg5[%c0_41, %c94] : memref<2x435xf32, #tpu.memory_space<vmem>>, vector<1x256xf32>
    %c8 = arith.constant 8 : index
    %96 = memref.load %arg1[%c8] : memref<98xf32, #tpu.memory_space<smem>>
    %97 = vector.broadcast %96 : f32 to vector<1x256xf32>
    %98 = arith.mulf %95, %97 : vector<1x256xf32>
    %99 = arith.addf %94, %98 : vector<1x256xf32>
    %c0_42 = arith.constant 0 : index
    %c110 = arith.constant 110 : index
    %100 = vector.load %arg5[%c0_42, %c110] : memref<2x435xf32, #tpu.memory_space<vmem>>, vector<1x256xf32>
    %c15 = arith.constant 15 : index
    %101 = memref.load %arg1[%c15] : memref<98xf32, #tpu.memory_space<smem>>
    %102 = vector.broadcast %101 : f32 to vector<1x256xf32>
    %103 = arith.mulf %100, %102 : vector<1x256xf32>
    %104 = arith.addf %99, %103 : vector<1x256xf32>
    %c0_43 = arith.constant 0 : index
    %c126 = arith.constant 126 : index
    %105 = vector.load %arg5[%c0_43, %c126] : memref<2x435xf32, #tpu.memory_space<vmem>>, vector<1x256xf32>
    %c22 = arith.constant 22 : index
    %106 = memref.load %arg1[%c22] : memref<98xf32, #tpu.memory_space<smem>>
    %107 = vector.broadcast %106 : f32 to vector<1x256xf32>
    %108 = arith.mulf %105, %107 : vector<1x256xf32>
    %109 = arith.addf %104, %108 : vector<1x256xf32>
    %c0_44 = arith.constant 0 : index
    %c142 = arith.constant 142 : index
    %110 = vector.load %arg5[%c0_44, %c142] : memref<2x435xf32, #tpu.memory_space<vmem>>, vector<1x256xf32>
    %c29 = arith.constant 29 : index
    %111 = memref.load %arg1[%c29] : memref<98xf32, #tpu.memory_space<smem>>
    %112 = vector.broadcast %111 : f32 to vector<1x256xf32>
    %113 = arith.mulf %110, %112 : vector<1x256xf32>
    %114 = arith.addf %109, %113 : vector<1x256xf32>
    %c0_45 = arith.constant 0 : index
    %c158 = arith.constant 158 : index
    %115 = vector.load %arg5[%c0_45, %c158] : memref<2x435xf32, #tpu.memory_space<vmem>>, vector<1x256xf32>
    %c36 = arith.constant 36 : index
    %116 = memref.load %arg1[%c36] : memref<98xf32, #tpu.memory_space<smem>>
    %117 = vector.broadcast %116 : f32 to vector<1x256xf32>
    %118 = arith.mulf %115, %117 : vector<1x256xf32>
    %119 = arith.addf %114, %118 : vector<1x256xf32>
    %c0_46 = arith.constant 0 : index
    %c174 = arith.constant 174 : index
    %120 = vector.load %arg5[%c0_46, %c174] : memref<2x435xf32, #tpu.memory_space<vmem>>, vector<1x256xf32>
    %c43 = arith.constant 43 : index
    %121 = memref.load %arg1[%c43] : memref<98xf32, #tpu.memory_space<smem>>
    %122 = vector.broadcast %121 : f32 to vector<1x256xf32>
    %123 = arith.mulf %120, %122 : vector<1x256xf32>
    %124 = arith.addf %119, %123 : vector<1x256xf32>
    %c1_47 = arith.constant 1 : index
    %c78_48 = arith.constant 78 : index
    %125 = vector.load %arg5[%c1_47, %c78_48] : memref<2x435xf32, #tpu.memory_space<vmem>>, vector<1x256xf32>
    %c50 = arith.constant 50 : index
    %126 = memref.load %arg1[%c50] : memref<98xf32, #tpu.memory_space<smem>>
    %127 = vector.broadcast %126 : f32 to vector<1x256xf32>
    %128 = arith.mulf %125, %127 : vector<1x256xf32>
    %129 = arith.addf %124, %128 : vector<1x256xf32>
    %c1_49 = arith.constant 1 : index
    %c94_50 = arith.constant 94 : index
    %130 = vector.load %arg5[%c1_49, %c94_50] : memref<2x435xf32, #tpu.memory_space<vmem>>, vector<1x256xf32>
    %c57 = arith.constant 57 : index
    %131 = memref.load %arg1[%c57] : memref<98xf32, #tpu.memory_space<smem>>
    %132 = vector.broadcast %131 : f32 to vector<1x256xf32>
    %133 = arith.mulf %130, %132 : vector<1x256xf32>
    %134 = arith.addf %129, %133 : vector<1x256xf32>
    %c1_51 = arith.constant 1 : index
    %c110_52 = arith.constant 110 : index
    %135 = vector.load %arg5[%c1_51, %c110_52] : memref<2x435xf32, #tpu.memory_space<vmem>>, vector<1x256xf32>
    %c64 = arith.constant 64 : index
    %136 = memref.load %arg1[%c64] : memref<98xf32, #tpu.memory_space<smem>>
    %137 = vector.broadcast %136 : f32 to vector<1x256xf32>
    %138 = arith.mulf %135, %137 : vector<1x256xf32>
    %139 = arith.addf %134, %138 : vector<1x256xf32>
    %c1_53 = arith.constant 1 : index
    %c126_54 = arith.constant 126 : index
    %140 = vector.load %arg5[%c1_53, %c126_54] : memref<2x435xf32, #tpu.memory_space<vmem>>, vector<1x256xf32>
    %c71 = arith.constant 71 : index
    %141 = memref.load %arg1[%c71] : memref<98xf32, #tpu.memory_space<smem>>
    %142 = vector.broadcast %141 : f32 to vector<1x256xf32>
    %143 = arith.mulf %140, %142 : vector<1x256xf32>
    %144 = arith.addf %139, %143 : vector<1x256xf32>
    %c1_55 = arith.constant 1 : index
    %c142_56 = arith.constant 142 : index
    %145 = vector.load %arg5[%c1_55, %c142_56] : memref<2x435xf32, #tpu.memory_space<vmem>>, vector<1x256xf32>
    %c78_57 = arith.constant 78 : index
    %146 = memref.load %arg1[%c78_57] : memref<98xf32, #tpu.memory_space<smem>>
    %147 = vector.broadcast %146 : f32 to vector<1x256xf32>
    %148 = arith.mulf %145, %147 : vector<1x256xf32>
    %149 = arith.addf %144, %148 : vector<1x256xf32>
    %c1_58 = arith.constant 1 : index
    %c158_59 = arith.constant 158 : index
    %150 = vector.load %arg5[%c1_58, %c158_59] : memref<2x435xf32, #tpu.memory_space<vmem>>, vector<1x256xf32>
    %c85 = arith.constant 85 : index
    %151 = memref.load %arg1[%c85] : memref<98xf32, #tpu.memory_space<smem>>
    %152 = vector.broadcast %151 : f32 to vector<1x256xf32>
    %153 = arith.mulf %150, %152 : vector<1x256xf32>
    %154 = arith.addf %149, %153 : vector<1x256xf32>
    %c1_60 = arith.constant 1 : index
    %c174_61 = arith.constant 174 : index
    %155 = vector.load %arg5[%c1_60, %c174_61] : memref<2x435xf32, #tpu.memory_space<vmem>>, vector<1x256xf32>
    %c92 = arith.constant 92 : index
    %156 = memref.load %arg1[%c92] : memref<98xf32, #tpu.memory_space<smem>>
    %157 = vector.broadcast %156 : f32 to vector<1x256xf32>
    %158 = arith.mulf %155, %157 : vector<1x256xf32>
    %159 = arith.addf %154, %158 : vector<1x256xf32>
    %c1_62 = arith.constant 1 : index
    %c0_63 = arith.constant 0 : index
    %160 = vector.load %arg2[%c1_62, %c0_63] : memref<7x256xf32, #tpu.memory_space<vmem>>, vector<1x256xf32>
    %161 = arith.mulf %159, %160 : vector<1x256xf32>
    %162 = arith.addf %88, %161 : vector<1x256xf32>
    %cst_64 = arith.constant 0.000000e+00 : f32
    %163 = vector.broadcast %cst_64 : f32 to vector<1x256xf32>
    %c0_65 = arith.constant 0 : index
    %c79 = arith.constant 79 : index
    %164 = vector.load %arg5[%c0_65, %c79] : memref<2x435xf32, #tpu.memory_space<vmem>>, vector<1x256xf32>
    %c2 = arith.constant 2 : index
    %165 = memref.load %arg1[%c2] : memref<98xf32, #tpu.memory_space<smem>>
    %166 = vector.broadcast %165 : f32 to vector<1x256xf32>
    %167 = arith.mulf %164, %166 : vector<1x256xf32>
    %168 = arith.addf %163, %167 : vector<1x256xf32>
    %c0_66 = arith.constant 0 : index
    %c95 = arith.constant 95 : index
    %169 = vector.load %arg5[%c0_66, %c95] : memref<2x435xf32, #tpu.memory_space<vmem>>, vector<1x256xf32>
    %c9 = arith.constant 9 : index
    %170 = memref.load %arg1[%c9] : memref<98xf32, #tpu.memory_space<smem>>
    %171 = vector.broadcast %170 : f32 to vector<1x256xf32>
    %172 = arith.mulf %169, %171 : vector<1x256xf32>
    %173 = arith.addf %168, %172 : vector<1x256xf32>
    %c0_67 = arith.constant 0 : index
    %c111 = arith.constant 111 : index
    %174 = vector.load %arg5[%c0_67, %c111] : memref<2x435xf32, #tpu.memory_space<vmem>>, vector<1x256xf32>
    %c16 = arith.constant 16 : index
    %175 = memref.load %arg1[%c16] : memref<98xf32, #tpu.memory_space<smem>>
    %176 = vector.broadcast %175 : f32 to vector<1x256xf32>
    %177 = arith.mulf %174, %176 : vector<1x256xf32>
    %178 = arith.addf %173, %177 : vector<1x256xf32>
    %c0_68 = arith.constant 0 : index
    %c127 = arith.constant 127 : index
    %179 = vector.load %arg5[%c0_68, %c127] : memref<2x435xf32, #tpu.memory_space<vmem>>, vector<1x256xf32>
    %c23 = arith.constant 23 : index
    %180 = memref.load %arg1[%c23] : memref<98xf32, #tpu.memory_space<smem>>
    %181 = vector.broadcast %180 : f32 to vector<1x256xf32>
    %182 = arith.mulf %179, %181 : vector<1x256xf32>
    %183 = arith.addf %178, %182 : vector<1x256xf32>
    %c0_69 = arith.constant 0 : index
    %c143 = arith.constant 143 : index
    %184 = vector.load %arg5[%c0_69, %c143] : memref<2x435xf32, #tpu.memory_space<vmem>>, vector<1x256xf32>
    %c30 = arith.constant 30 : index
    %185 = memref.load %arg1[%c30] : memref<98xf32, #tpu.memory_space<smem>>
    %186 = vector.broadcast %185 : f32 to vector<1x256xf32>
    %187 = arith.mulf %184, %186 : vector<1x256xf32>
    %188 = arith.addf %183, %187 : vector<1x256xf32>
    %c0_70 = arith.constant 0 : index
    %c159 = arith.constant 159 : index
    %189 = vector.load %arg5[%c0_70, %c159] : memref<2x435xf32, #tpu.memory_space<vmem>>, vector<1x256xf32>
    %c37 = arith.constant 37 : index
    %190 = memref.load %arg1[%c37] : memref<98xf32, #tpu.memory_space<smem>>
    %191 = vector.broadcast %190 : f32 to vector<1x256xf32>
    %192 = arith.mulf %189, %191 : vector<1x256xf32>
    %193 = arith.addf %188, %192 : vector<1x256xf32>
    %c0_71 = arith.constant 0 : index
    %c175 = arith.constant 175 : index
    %194 = vector.load %arg5[%c0_71, %c175] : memref<2x435xf32, #tpu.memory_space<vmem>>, vector<1x256xf32>
    %c44 = arith.constant 44 : index
    %195 = memref.load %arg1[%c44] : memref<98xf32, #tpu.memory_space<smem>>
    %196 = vector.broadcast %195 : f32 to vector<1x256xf32>
    %197 = arith.mulf %194, %196 : vector<1x256xf32>
    %198 = arith.addf %193, %197 : vector<1x256xf32>
    %c1_72 = arith.constant 1 : index
    %c79_73 = arith.constant 79 : index
    %199 = vector.load %arg5[%c1_72, %c79_73] : memref<2x435xf32, #tpu.memory_space<vmem>>, vector<1x256xf32>
    %c51 = arith.constant 51 : index
    %200 = memref.load %arg1[%c51] : memref<98xf32, #tpu.memory_space<smem>>
    %201 = vector.broadcast %200 : f32 to vector<1x256xf32>
    %202 = arith.mulf %199, %201 : vector<1x256xf32>
    %203 = arith.addf %198, %202 : vector<1x256xf32>
    %c1_74 = arith.constant 1 : index
    %c95_75 = arith.constant 95 : index
    %204 = vector.load %arg5[%c1_74, %c95_75] : memref<2x435xf32, #tpu.memory_space<vmem>>, vector<1x256xf32>
    %c58 = arith.constant 58 : index
    %205 = memref.load %arg1[%c58] : memref<98xf32, #tpu.memory_space<smem>>
    %206 = vector.broadcast %205 : f32 to vector<1x256xf32>
    %207 = arith.mulf %204, %206 : vector<1x256xf32>
    %208 = arith.addf %203, %207 : vector<1x256xf32>
    %c1_76 = arith.constant 1 : index
    %c111_77 = arith.constant 111 : index
    %209 = vector.load %arg5[%c1_76, %c111_77] : memref<2x435xf32, #tpu.memory_space<vmem>>, vector<1x256xf32>
    %c65 = arith.constant 65 : index
    %210 = memref.load %arg1[%c65] : memref<98xf32, #tpu.memory_space<smem>>
    %211 = vector.broadcast %210 : f32 to vector<1x256xf32>
    %212 = arith.mulf %209, %211 : vector<1x256xf32>
    %213 = arith.addf %208, %212 : vector<1x256xf32>
    %c1_78 = arith.constant 1 : index
    %c127_79 = arith.constant 127 : index
    %214 = vector.load %arg5[%c1_78, %c127_79] : memref<2x435xf32, #tpu.memory_space<vmem>>, vector<1x256xf32>
    %c72 = arith.constant 72 : index
    %215 = memref.load %arg1[%c72] : memref<98xf32, #tpu.memory_space<smem>>
    %216 = vector.broadcast %215 : f32 to vector<1x256xf32>
    %217 = arith.mulf %214, %216 : vector<1x256xf32>
    %218 = arith.addf %213, %217 : vector<1x256xf32>
    %c1_80 = arith.constant 1 : index
    %c143_81 = arith.constant 143 : index
    %219 = vector.load %arg5[%c1_80, %c143_81] : memref<2x435xf32, #tpu.memory_space<vmem>>, vector<1x256xf32>
    %c79_82 = arith.constant 79 : index
    %220 = memref.load %arg1[%c79_82] : memref<98xf32, #tpu.memory_space<smem>>
    %221 = vector.broadcast %220 : f32 to vector<1x256xf32>
    %222 = arith.mulf %219, %221 : vector<1x256xf32>
    %223 = arith.addf %218, %222 : vector<1x256xf32>
    %c1_83 = arith.constant 1 : index
    %c159_84 = arith.constant 159 : index
    %224 = vector.load %arg5[%c1_83, %c159_84] : memref<2x435xf32, #tpu.memory_space<vmem>>, vector<1x256xf32>
    %c86 = arith.constant 86 : index
    %225 = memref.load %arg1[%c86] : memref<98xf32, #tpu.memory_space<smem>>
    %226 = vector.broadcast %225 : f32 to vector<1x256xf32>
    %227 = arith.mulf %224, %226 : vector<1x256xf32>
    %228 = arith.addf %223, %227 : vector<1x256xf32>
    %c1_85 = arith.constant 1 : index
    %c175_86 = arith.constant 175 : index
    %229 = vector.load %arg5[%c1_85, %c175_86] : memref<2x435xf32, #tpu.memory_space<vmem>>, vector<1x256xf32>
    %c93_87 = arith.constant 93 : index
    %230 = memref.load %arg1[%c93_87] : memref<98xf32, #tpu.memory_space<smem>>
    %231 = vector.broadcast %230 : f32 to vector<1x256xf32>
    %232 = arith.mulf %229, %231 : vector<1x256xf32>
    %233 = arith.addf %228, %232 : vector<1x256xf32>
    %c2_88 = arith.constant 2 : index
    %c0_89 = arith.constant 0 : index
    %234 = vector.load %arg2[%c2_88, %c0_89] : memref<7x256xf32, #tpu.memory_space<vmem>>, vector<1x256xf32>
    %235 = arith.mulf %233, %234 : vector<1x256xf32>
    %236 = arith.addf %162, %235 : vector<1x256xf32>
    %cst_90 = arith.constant 0.000000e+00 : f32
    %237 = vector.broadcast %cst_90 : f32 to vector<1x256xf32>
    %c0_91 = arith.constant 0 : index
    %c80 = arith.constant 80 : index
    %238 = vector.load %arg5[%c0_91, %c80] : memref<2x435xf32, #tpu.memory_space<vmem>>, vector<1x256xf32>
    %c3 = arith.constant 3 : index
    %239 = memref.load %arg1[%c3] : memref<98xf32, #tpu.memory_space<smem>>
    %240 = vector.broadcast %239 : f32 to vector<1x256xf32>
    %241 = arith.mulf %238, %240 : vector<1x256xf32>
    %242 = arith.addf %237, %241 : vector<1x256xf32>
    %c0_92 = arith.constant 0 : index
    %c96 = arith.constant 96 : index
    %243 = vector.load %arg5[%c0_92, %c96] : memref<2x435xf32, #tpu.memory_space<vmem>>, vector<1x256xf32>
    %c10 = arith.constant 10 : index
    %244 = memref.load %arg1[%c10] : memref<98xf32, #tpu.memory_space<smem>>
    %245 = vector.broadcast %244 : f32 to vector<1x256xf32>
    %246 = arith.mulf %243, %245 : vector<1x256xf32>
    %247 = arith.addf %242, %246 : vector<1x256xf32>
    %c0_93 = arith.constant 0 : index
    %c112 = arith.constant 112 : index
    %248 = vector.load %arg5[%c0_93, %c112] : memref<2x435xf32, #tpu.memory_space<vmem>>, vector<1x256xf32>
    %c17 = arith.constant 17 : index
    %249 = memref.load %arg1[%c17] : memref<98xf32, #tpu.memory_space<smem>>
    %250 = vector.broadcast %249 : f32 to vector<1x256xf32>
    %251 = arith.mulf %248, %250 : vector<1x256xf32>
    %252 = arith.addf %247, %251 : vector<1x256xf32>
    %c0_94 = arith.constant 0 : index
    %c128_95 = arith.constant 128 : index
    %253 = vector.load %arg5[%c0_94, %c128_95] : memref<2x435xf32, #tpu.memory_space<vmem>>, vector<1x256xf32>
    %c24 = arith.constant 24 : index
    %254 = memref.load %arg1[%c24] : memref<98xf32, #tpu.memory_space<smem>>
    %255 = vector.broadcast %254 : f32 to vector<1x256xf32>
    %256 = arith.mulf %253, %255 : vector<1x256xf32>
    %257 = arith.addf %252, %256 : vector<1x256xf32>
    %c0_96 = arith.constant 0 : index
    %c144 = arith.constant 144 : index
    %258 = vector.load %arg5[%c0_96, %c144] : memref<2x435xf32, #tpu.memory_space<vmem>>, vector<1x256xf32>
    %c31 = arith.constant 31 : index
    %259 = memref.load %arg1[%c31] : memref<98xf32, #tpu.memory_space<smem>>
    %260 = vector.broadcast %259 : f32 to vector<1x256xf32>
    %261 = arith.mulf %258, %260 : vector<1x256xf32>
    %262 = arith.addf %257, %261 : vector<1x256xf32>
    %c0_97 = arith.constant 0 : index
    %c160 = arith.constant 160 : index
    %263 = vector.load %arg5[%c0_97, %c160] : memref<2x435xf32, #tpu.memory_space<vmem>>, vector<1x256xf32>
    %c38 = arith.constant 38 : index
    %264 = memref.load %arg1[%c38] : memref<98xf32, #tpu.memory_space<smem>>
    %265 = vector.broadcast %264 : f32 to vector<1x256xf32>
    %266 = arith.mulf %263, %265 : vector<1x256xf32>
    %267 = arith.addf %262, %266 : vector<1x256xf32>
    %c0_98 = arith.constant 0 : index
    %c176 = arith.constant 176 : index
    %268 = vector.load %arg5[%c0_98, %c176] : memref<2x435xf32, #tpu.memory_space<vmem>>, vector<1x256xf32>
    %c45 = arith.constant 45 : index
    %269 = memref.load %arg1[%c45] : memref<98xf32, #tpu.memory_space<smem>>
    %270 = vector.broadcast %269 : f32 to vector<1x256xf32>
    %271 = arith.mulf %268, %270 : vector<1x256xf32>
    %272 = arith.addf %267, %271 : vector<1x256xf32>
    %c1_99 = arith.constant 1 : index
    %c80_100 = arith.constant 80 : index
    %273 = vector.load %arg5[%c1_99, %c80_100] : memref<2x435xf32, #tpu.memory_space<vmem>>, vector<1x256xf32>
    %c52 = arith.constant 52 : index
    %274 = memref.load %arg1[%c52] : memref<98xf32, #tpu.memory_space<smem>>
    %275 = vector.broadcast %274 : f32 to vector<1x256xf32>
    %276 = arith.mulf %273, %275 : vector<1x256xf32>
    %277 = arith.addf %272, %276 : vector<1x256xf32>
    %c1_101 = arith.constant 1 : index
    %c96_102 = arith.constant 96 : index
    %278 = vector.load %arg5[%c1_101, %c96_102] : memref<2x435xf32, #tpu.memory_space<vmem>>, vector<1x256xf32>
    %c59 = arith.constant 59 : index
    %279 = memref.load %arg1[%c59] : memref<98xf32, #tpu.memory_space<smem>>
    %280 = vector.broadcast %279 : f32 to vector<1x256xf32>
    %281 = arith.mulf %278, %280 : vector<1x256xf32>
    %282 = arith.addf %277, %281 : vector<1x256xf32>
    %c1_103 = arith.constant 1 : index
    %c112_104 = arith.constant 112 : index
    %283 = vector.load %arg5[%c1_103, %c112_104] : memref<2x435xf32, #tpu.memory_space<vmem>>, vector<1x256xf32>
    %c66 = arith.constant 66 : index
    %284 = memref.load %arg1[%c66] : memref<98xf32, #tpu.memory_space<smem>>
    %285 = vector.broadcast %284 : f32 to vector<1x256xf32>
    %286 = arith.mulf %283, %285 : vector<1x256xf32>
    %287 = arith.addf %282, %286 : vector<1x256xf32>
    %c1_105 = arith.constant 1 : index
    %c128_106 = arith.constant 128 : index
    %288 = vector.load %arg5[%c1_105, %c128_106] : memref<2x435xf32, #tpu.memory_space<vmem>>, vector<1x256xf32>
    %c73 = arith.constant 73 : index
    %289 = memref.load %arg1[%c73] : memref<98xf32, #tpu.memory_space<smem>>
    %290 = vector.broadcast %289 : f32 to vector<1x256xf32>
    %291 = arith.mulf %288, %290 : vector<1x256xf32>
    %292 = arith.addf %287, %291 : vector<1x256xf32>
    %c1_107 = arith.constant 1 : index
    %c144_108 = arith.constant 144 : index
    %293 = vector.load %arg5[%c1_107, %c144_108] : memref<2x435xf32, #tpu.memory_space<vmem>>, vector<1x256xf32>
    %c80_109 = arith.constant 80 : index
    %294 = memref.load %arg1[%c80_109] : memref<98xf32, #tpu.memory_space<smem>>
    %295 = vector.broadcast %294 : f32 to vector<1x256xf32>
    %296 = arith.mulf %293, %295 : vector<1x256xf32>
    %297 = arith.addf %292, %296 : vector<1x256xf32>
    %c1_110 = arith.constant 1 : index
    %c160_111 = arith.constant 160 : index
    %298 = vector.load %arg5[%c1_110, %c160_111] : memref<2x435xf32, #tpu.memory_space<vmem>>, vector<1x256xf32>
    %c87 = arith.constant 87 : index
    %299 = memref.load %arg1[%c87] : memref<98xf32, #tpu.memory_space<smem>>
    %300 = vector.broadcast %299 : f32 to vector<1x256xf32>
    %301 = arith.mulf %298, %300 : vector<1x256xf32>
    %302 = arith.addf %297, %301 : vector<1x256xf32>
    %c1_112 = arith.constant 1 : index
    %c176_113 = arith.constant 176 : index
    %303 = vector.load %arg5[%c1_112, %c176_113] : memref<2x435xf32, #tpu.memory_space<vmem>>, vector<1x256xf32>
    %c94_114 = arith.constant 94 : index
    %304 = memref.load %arg1[%c94_114] : memref<98xf32, #tpu.memory_space<smem>>
    %305 = vector.broadcast %304 : f32 to vector<1x256xf32>
    %306 = arith.mulf %303, %305 : vector<1x256xf32>
    %307 = arith.addf %302, %306 : vector<1x256xf32>
    %c3_115 = arith.constant 3 : index
    %c0_116 = arith.constant 0 : index
    %308 = vector.load %arg2[%c3_115, %c0_116] : memref<7x256xf32, #tpu.memory_space<vmem>>, vector<1x256xf32>
    %309 = arith.mulf %307, %308 : vector<1x256xf32>
    %310 = arith.addf %236, %309 : vector<1x256xf32>
    %cst_117 = arith.constant 0.000000e+00 : f32
    %311 = vector.broadcast %cst_117 : f32 to vector<1x256xf32>
    %c0_118 = arith.constant 0 : index
    %c81 = arith.constant 81 : index
    %312 = vector.load %arg5[%c0_118, %c81] : memref<2x435xf32, #tpu.memory_space<vmem>>, vector<1x256xf32>
    %c4 = arith.constant 4 : index
    %313 = memref.load %arg1[%c4] : memref<98xf32, #tpu.memory_space<smem>>
    %314 = vector.broadcast %313 : f32 to vector<1x256xf32>
    %315 = arith.mulf %312, %314 : vector<1x256xf32>
    %316 = arith.addf %311, %315 : vector<1x256xf32>
    %c0_119 = arith.constant 0 : index
    %c97 = arith.constant 97 : index
    %317 = vector.load %arg5[%c0_119, %c97] : memref<2x435xf32, #tpu.memory_space<vmem>>, vector<1x256xf32>
    %c11 = arith.constant 11 : index
    %318 = memref.load %arg1[%c11] : memref<98xf32, #tpu.memory_space<smem>>
    %319 = vector.broadcast %318 : f32 to vector<1x256xf32>
    %320 = arith.mulf %317, %319 : vector<1x256xf32>
    %321 = arith.addf %316, %320 : vector<1x256xf32>
    %c0_120 = arith.constant 0 : index
    %c113 = arith.constant 113 : index
    %322 = vector.load %arg5[%c0_120, %c113] : memref<2x435xf32, #tpu.memory_space<vmem>>, vector<1x256xf32>
    %c18 = arith.constant 18 : index
    %323 = memref.load %arg1[%c18] : memref<98xf32, #tpu.memory_space<smem>>
    %324 = vector.broadcast %323 : f32 to vector<1x256xf32>
    %325 = arith.mulf %322, %324 : vector<1x256xf32>
    %326 = arith.addf %321, %325 : vector<1x256xf32>
    %c0_121 = arith.constant 0 : index
    %c129 = arith.constant 129 : index
    %327 = vector.load %arg5[%c0_121, %c129] : memref<2x435xf32, #tpu.memory_space<vmem>>, vector<1x256xf32>
    %c25 = arith.constant 25 : index
    %328 = memref.load %arg1[%c25] : memref<98xf32, #tpu.memory_space<smem>>
    %329 = vector.broadcast %328 : f32 to vector<1x256xf32>
    %330 = arith.mulf %327, %329 : vector<1x256xf32>
    %331 = arith.addf %326, %330 : vector<1x256xf32>
    %c0_122 = arith.constant 0 : index
    %c145 = arith.constant 145 : index
    %332 = vector.load %arg5[%c0_122, %c145] : memref<2x435xf32, #tpu.memory_space<vmem>>, vector<1x256xf32>
    %c32 = arith.constant 32 : index
    %333 = memref.load %arg1[%c32] : memref<98xf32, #tpu.memory_space<smem>>
    %334 = vector.broadcast %333 : f32 to vector<1x256xf32>
    %335 = arith.mulf %332, %334 : vector<1x256xf32>
    %336 = arith.addf %331, %335 : vector<1x256xf32>
    %c0_123 = arith.constant 0 : index
    %c161 = arith.constant 161 : index
    %337 = vector.load %arg5[%c0_123, %c161] : memref<2x435xf32, #tpu.memory_space<vmem>>, vector<1x256xf32>
    %c39 = arith.constant 39 : index
    %338 = memref.load %arg1[%c39] : memref<98xf32, #tpu.memory_space<smem>>
    %339 = vector.broadcast %338 : f32 to vector<1x256xf32>
    %340 = arith.mulf %337, %339 : vector<1x256xf32>
    %341 = arith.addf %336, %340 : vector<1x256xf32>
    %c0_124 = arith.constant 0 : index
    %c177 = arith.constant 177 : index
    %342 = vector.load %arg5[%c0_124, %c177] : memref<2x435xf32, #tpu.memory_space<vmem>>, vector<1x256xf32>
    %c46 = arith.constant 46 : index
    %343 = memref.load %arg1[%c46] : memref<98xf32, #tpu.memory_space<smem>>
    %344 = vector.broadcast %343 : f32 to vector<1x256xf32>
    %345 = arith.mulf %342, %344 : vector<1x256xf32>
    %346 = arith.addf %341, %345 : vector<1x256xf32>
    %c1_125 = arith.constant 1 : index
    %c81_126 = arith.constant 81 : index
    %347 = vector.load %arg5[%c1_125, %c81_126] : memref<2x435xf32, #tpu.memory_space<vmem>>, vector<1x256xf32>
    %c53 = arith.constant 53 : index
    %348 = memref.load %arg1[%c53] : memref<98xf32, #tpu.memory_space<smem>>
    %349 = vector.broadcast %348 : f32 to vector<1x256xf32>
    %350 = arith.mulf %347, %349 : vector<1x256xf32>
    %351 = arith.addf %346, %350 : vector<1x256xf32>
    %c1_127 = arith.constant 1 : index
    %c97_128 = arith.constant 97 : index
    %352 = vector.load %arg5[%c1_127, %c97_128] : memref<2x435xf32, #tpu.memory_space<vmem>>, vector<1x256xf32>
    %c60 = arith.constant 60 : index
    %353 = memref.load %arg1[%c60] : memref<98xf32, #tpu.memory_space<smem>>
    %354 = vector.broadcast %353 : f32 to vector<1x256xf32>
    %355 = arith.mulf %352, %354 : vector<1x256xf32>
    %356 = arith.addf %351, %355 : vector<1x256xf32>
    %c1_129 = arith.constant 1 : index
    %c113_130 = arith.constant 113 : index
    %357 = vector.load %arg5[%c1_129, %c113_130] : memref<2x435xf32, #tpu.memory_space<vmem>>, vector<1x256xf32>
    %c67 = arith.constant 67 : index
    %358 = memref.load %arg1[%c67] : memref<98xf32, #tpu.memory_space<smem>>
    %359 = vector.broadcast %358 : f32 to vector<1x256xf32>
    %360 = arith.mulf %357, %359 : vector<1x256xf32>
    %361 = arith.addf %356, %360 : vector<1x256xf32>
    %c1_131 = arith.constant 1 : index
    %c129_132 = arith.constant 129 : index
    %362 = vector.load %arg5[%c1_131, %c129_132] : memref<2x435xf32, #tpu.memory_space<vmem>>, vector<1x256xf32>
    %c74 = arith.constant 74 : index
    %363 = memref.load %arg1[%c74] : memref<98xf32, #tpu.memory_space<smem>>
    %364 = vector.broadcast %363 : f32 to vector<1x256xf32>
    %365 = arith.mulf %362, %364 : vector<1x256xf32>
    %366 = arith.addf %361, %365 : vector<1x256xf32>
    %c1_133 = arith.constant 1 : index
    %c145_134 = arith.constant 145 : index
    %367 = vector.load %arg5[%c1_133, %c145_134] : memref<2x435xf32, #tpu.memory_space<vmem>>, vector<1x256xf32>
    %c81_135 = arith.constant 81 : index
    %368 = memref.load %arg1[%c81_135] : memref<98xf32, #tpu.memory_space<smem>>
    %369 = vector.broadcast %368 : f32 to vector<1x256xf32>
    %370 = arith.mulf %367, %369 : vector<1x256xf32>
    %371 = arith.addf %366, %370 : vector<1x256xf32>
    %c1_136 = arith.constant 1 : index
    %c161_137 = arith.constant 161 : index
    %372 = vector.load %arg5[%c1_136, %c161_137] : memref<2x435xf32, #tpu.memory_space<vmem>>, vector<1x256xf32>
    %c88 = arith.constant 88 : index
    %373 = memref.load %arg1[%c88] : memref<98xf32, #tpu.memory_space<smem>>
    %374 = vector.broadcast %373 : f32 to vector<1x256xf32>
    %375 = arith.mulf %372, %374 : vector<1x256xf32>
    %376 = arith.addf %371, %375 : vector<1x256xf32>
    %c1_138 = arith.constant 1 : index
    %c177_139 = arith.constant 177 : index
    %377 = vector.load %arg5[%c1_138, %c177_139] : memref<2x435xf32, #tpu.memory_space<vmem>>, vector<1x256xf32>
    %c95_140 = arith.constant 95 : index
    %378 = memref.load %arg1[%c95_140] : memref<98xf32, #tpu.memory_space<smem>>
    %379 = vector.broadcast %378 : f32 to vector<1x256xf32>
    %380 = arith.mulf %377, %379 : vector<1x256xf32>
    %381 = arith.addf %376, %380 : vector<1x256xf32>
    %c4_141 = arith.constant 4 : index
    %c0_142 = arith.constant 0 : index
    %382 = vector.load %arg2[%c4_141, %c0_142] : memref<7x256xf32, #tpu.memory_space<vmem>>, vector<1x256xf32>
    %383 = arith.mulf %381, %382 : vector<1x256xf32>
    %384 = arith.addf %310, %383 : vector<1x256xf32>
    %cst_143 = arith.constant 0.000000e+00 : f32
    %385 = vector.broadcast %cst_143 : f32 to vector<1x256xf32>
    %c0_144 = arith.constant 0 : index
    %c82 = arith.constant 82 : index
    %386 = vector.load %arg5[%c0_144, %c82] : memref<2x435xf32, #tpu.memory_space<vmem>>, vector<1x256xf32>
    %c5 = arith.constant 5 : index
    %387 = memref.load %arg1[%c5] : memref<98xf32, #tpu.memory_space<smem>>
    %388 = vector.broadcast %387 : f32 to vector<1x256xf32>
    %389 = arith.mulf %386, %388 : vector<1x256xf32>
    %390 = arith.addf %385, %389 : vector<1x256xf32>
    %c0_145 = arith.constant 0 : index
    %c98 = arith.constant 98 : index
    %391 = vector.load %arg5[%c0_145, %c98] : memref<2x435xf32, #tpu.memory_space<vmem>>, vector<1x256xf32>
    %c12 = arith.constant 12 : index
    %392 = memref.load %arg1[%c12] : memref<98xf32, #tpu.memory_space<smem>>
    %393 = vector.broadcast %392 : f32 to vector<1x256xf32>
    %394 = arith.mulf %391, %393 : vector<1x256xf32>
    %395 = arith.addf %390, %394 : vector<1x256xf32>
    %c0_146 = arith.constant 0 : index
    %c114 = arith.constant 114 : index
    %396 = vector.load %arg5[%c0_146, %c114] : memref<2x435xf32, #tpu.memory_space<vmem>>, vector<1x256xf32>
    %c19 = arith.constant 19 : index
    %397 = memref.load %arg1[%c19] : memref<98xf32, #tpu.memory_space<smem>>
    %398 = vector.broadcast %397 : f32 to vector<1x256xf32>
    %399 = arith.mulf %396, %398 : vector<1x256xf32>
    %400 = arith.addf %395, %399 : vector<1x256xf32>
    %c0_147 = arith.constant 0 : index
    %c130 = arith.constant 130 : index
    %401 = vector.load %arg5[%c0_147, %c130] : memref<2x435xf32, #tpu.memory_space<vmem>>, vector<1x256xf32>
    %c26 = arith.constant 26 : index
    %402 = memref.load %arg1[%c26] : memref<98xf32, #tpu.memory_space<smem>>
    %403 = vector.broadcast %402 : f32 to vector<1x256xf32>
    %404 = arith.mulf %401, %403 : vector<1x256xf32>
    %405 = arith.addf %400, %404 : vector<1x256xf32>
    %c0_148 = arith.constant 0 : index
    %c146 = arith.constant 146 : index
    %406 = vector.load %arg5[%c0_148, %c146] : memref<2x435xf32, #tpu.memory_space<vmem>>, vector<1x256xf32>
    %c33 = arith.constant 33 : index
    %407 = memref.load %arg1[%c33] : memref<98xf32, #tpu.memory_space<smem>>
    %408 = vector.broadcast %407 : f32 to vector<1x256xf32>
    %409 = arith.mulf %406, %408 : vector<1x256xf32>
    %410 = arith.addf %405, %409 : vector<1x256xf32>
    %c0_149 = arith.constant 0 : index
    %c162 = arith.constant 162 : index
    %411 = vector.load %arg5[%c0_149, %c162] : memref<2x435xf32, #tpu.memory_space<vmem>>, vector<1x256xf32>
    %c40 = arith.constant 40 : index
    %412 = memref.load %arg1[%c40] : memref<98xf32, #tpu.memory_space<smem>>
    %413 = vector.broadcast %412 : f32 to vector<1x256xf32>
    %414 = arith.mulf %411, %413 : vector<1x256xf32>
    %415 = arith.addf %410, %414 : vector<1x256xf32>
    %c0_150 = arith.constant 0 : index
    %c178 = arith.constant 178 : index
    %416 = vector.load %arg5[%c0_150, %c178] : memref<2x435xf32, #tpu.memory_space<vmem>>, vector<1x256xf32>
    %c47 = arith.constant 47 : index
    %417 = memref.load %arg1[%c47] : memref<98xf32, #tpu.memory_space<smem>>
    %418 = vector.broadcast %417 : f32 to vector<1x256xf32>
    %419 = arith.mulf %416, %418 : vector<1x256xf32>
    %420 = arith.addf %415, %419 : vector<1x256xf32>
    %c1_151 = arith.constant 1 : index
    %c82_152 = arith.constant 82 : index
    %421 = vector.load %arg5[%c1_151, %c82_152] : memref<2x435xf32, #tpu.memory_space<vmem>>, vector<1x256xf32>
    %c54 = arith.constant 54 : index
    %422 = memref.load %arg1[%c54] : memref<98xf32, #tpu.memory_space<smem>>
    %423 = vector.broadcast %422 : f32 to vector<1x256xf32>
    %424 = arith.mulf %421, %423 : vector<1x256xf32>
    %425 = arith.addf %420, %424 : vector<1x256xf32>
    %c1_153 = arith.constant 1 : index
    %c98_154 = arith.constant 98 : index
    %426 = vector.load %arg5[%c1_153, %c98_154] : memref<2x435xf32, #tpu.memory_space<vmem>>, vector<1x256xf32>
    %c61 = arith.constant 61 : index
    %427 = memref.load %arg1[%c61] : memref<98xf32, #tpu.memory_space<smem>>
    %428 = vector.broadcast %427 : f32 to vector<1x256xf32>
    %429 = arith.mulf %426, %428 : vector<1x256xf32>
    %430 = arith.addf %425, %429 : vector<1x256xf32>
    %c1_155 = arith.constant 1 : index
    %c114_156 = arith.constant 114 : index
    %431 = vector.load %arg5[%c1_155, %c114_156] : memref<2x435xf32, #tpu.memory_space<vmem>>, vector<1x256xf32>
    %c68 = arith.constant 68 : index
    %432 = memref.load %arg1[%c68] : memref<98xf32, #tpu.memory_space<smem>>
    %433 = vector.broadcast %432 : f32 to vector<1x256xf32>
    %434 = arith.mulf %431, %433 : vector<1x256xf32>
    %435 = arith.addf %430, %434 : vector<1x256xf32>
    %c1_157 = arith.constant 1 : index
    %c130_158 = arith.constant 130 : index
    %436 = vector.load %arg5[%c1_157, %c130_158] : memref<2x435xf32, #tpu.memory_space<vmem>>, vector<1x256xf32>
    %c75 = arith.constant 75 : index
    %437 = memref.load %arg1[%c75] : memref<98xf32, #tpu.memory_space<smem>>
    %438 = vector.broadcast %437 : f32 to vector<1x256xf32>
    %439 = arith.mulf %436, %438 : vector<1x256xf32>
    %440 = arith.addf %435, %439 : vector<1x256xf32>
    %c1_159 = arith.constant 1 : index
    %c146_160 = arith.constant 146 : index
    %441 = vector.load %arg5[%c1_159, %c146_160] : memref<2x435xf32, #tpu.memory_space<vmem>>, vector<1x256xf32>
    %c82_161 = arith.constant 82 : index
    %442 = memref.load %arg1[%c82_161] : memref<98xf32, #tpu.memory_space<smem>>
    %443 = vector.broadcast %442 : f32 to vector<1x256xf32>
    %444 = arith.mulf %441, %443 : vector<1x256xf32>
    %445 = arith.addf %440, %444 : vector<1x256xf32>
    %c1_162 = arith.constant 1 : index
    %c162_163 = arith.constant 162 : index
    %446 = vector.load %arg5[%c1_162, %c162_163] : memref<2x435xf32, #tpu.memory_space<vmem>>, vector<1x256xf32>
    %c89 = arith.constant 89 : index
    %447 = memref.load %arg1[%c89] : memref<98xf32, #tpu.memory_space<smem>>
    %448 = vector.broadcast %447 : f32 to vector<1x256xf32>
    %449 = arith.mulf %446, %448 : vector<1x256xf32>
    %450 = arith.addf %445, %449 : vector<1x256xf32>
    %c1_164 = arith.constant 1 : index
    %c178_165 = arith.constant 178 : index
    %451 = vector.load %arg5[%c1_164, %c178_165] : memref<2x435xf32, #tpu.memory_space<vmem>>, vector<1x256xf32>
    %c96_166 = arith.constant 96 : index
    %452 = memref.load %arg1[%c96_166] : memref<98xf32, #tpu.memory_space<smem>>
    %453 = vector.broadcast %452 : f32 to vector<1x256xf32>
    %454 = arith.mulf %451, %453 : vector<1x256xf32>
    %455 = arith.addf %450, %454 : vector<1x256xf32>
    %c5_167 = arith.constant 5 : index
    %c0_168 = arith.constant 0 : index
    %456 = vector.load %arg2[%c5_167, %c0_168] : memref<7x256xf32, #tpu.memory_space<vmem>>, vector<1x256xf32>
    %457 = arith.mulf %455, %456 : vector<1x256xf32>
    %458 = arith.addf %384, %457 : vector<1x256xf32>
    %cst_169 = arith.constant 0.000000e+00 : f32
    %459 = vector.broadcast %cst_169 : f32 to vector<1x256xf32>
    %c0_170 = arith.constant 0 : index
    %c83 = arith.constant 83 : index
    %460 = vector.load %arg5[%c0_170, %c83] : memref<2x435xf32, #tpu.memory_space<vmem>>, vector<1x256xf32>
    %c6 = arith.constant 6 : index
    %461 = memref.load %arg1[%c6] : memref<98xf32, #tpu.memory_space<smem>>
    %462 = vector.broadcast %461 : f32 to vector<1x256xf32>
    %463 = arith.mulf %460, %462 : vector<1x256xf32>
    %464 = arith.addf %459, %463 : vector<1x256xf32>
    %c0_171 = arith.constant 0 : index
    %c99 = arith.constant 99 : index
    %465 = vector.load %arg5[%c0_171, %c99] : memref<2x435xf32, #tpu.memory_space<vmem>>, vector<1x256xf32>
    %c13 = arith.constant 13 : index
    %466 = memref.load %arg1[%c13] : memref<98xf32, #tpu.memory_space<smem>>
    %467 = vector.broadcast %466 : f32 to vector<1x256xf32>
    %468 = arith.mulf %465, %467 : vector<1x256xf32>
    %469 = arith.addf %464, %468 : vector<1x256xf32>
    %c0_172 = arith.constant 0 : index
    %c115 = arith.constant 115 : index
    %470 = vector.load %arg5[%c0_172, %c115] : memref<2x435xf32, #tpu.memory_space<vmem>>, vector<1x256xf32>
    %c20 = arith.constant 20 : index
    %471 = memref.load %arg1[%c20] : memref<98xf32, #tpu.memory_space<smem>>
    %472 = vector.broadcast %471 : f32 to vector<1x256xf32>
    %473 = arith.mulf %470, %472 : vector<1x256xf32>
    %474 = arith.addf %469, %473 : vector<1x256xf32>
    %c0_173 = arith.constant 0 : index
    %c131 = arith.constant 131 : index
    %475 = vector.load %arg5[%c0_173, %c131] : memref<2x435xf32, #tpu.memory_space<vmem>>, vector<1x256xf32>
    %c27 = arith.constant 27 : index
    %476 = memref.load %arg1[%c27] : memref<98xf32, #tpu.memory_space<smem>>
    %477 = vector.broadcast %476 : f32 to vector<1x256xf32>
    %478 = arith.mulf %475, %477 : vector<1x256xf32>
    %479 = arith.addf %474, %478 : vector<1x256xf32>
    %c0_174 = arith.constant 0 : index
    %c147 = arith.constant 147 : index
    %480 = vector.load %arg5[%c0_174, %c147] : memref<2x435xf32, #tpu.memory_space<vmem>>, vector<1x256xf32>
    %c34 = arith.constant 34 : index
    %481 = memref.load %arg1[%c34] : memref<98xf32, #tpu.memory_space<smem>>
    %482 = vector.broadcast %481 : f32 to vector<1x256xf32>
    %483 = arith.mulf %480, %482 : vector<1x256xf32>
    %484 = arith.addf %479, %483 : vector<1x256xf32>
    %c0_175 = arith.constant 0 : index
    %c163 = arith.constant 163 : index
    %485 = vector.load %arg5[%c0_175, %c163] : memref<2x435xf32, #tpu.memory_space<vmem>>, vector<1x256xf32>
    %c41 = arith.constant 41 : index
    %486 = memref.load %arg1[%c41] : memref<98xf32, #tpu.memory_space<smem>>
    %487 = vector.broadcast %486 : f32 to vector<1x256xf32>
    %488 = arith.mulf %485, %487 : vector<1x256xf32>
    %489 = arith.addf %484, %488 : vector<1x256xf32>
    %c0_176 = arith.constant 0 : index
    %c179 = arith.constant 179 : index
    %490 = vector.load %arg5[%c0_176, %c179] : memref<2x435xf32, #tpu.memory_space<vmem>>, vector<1x256xf32>
    %c48 = arith.constant 48 : index
    %491 = memref.load %arg1[%c48] : memref<98xf32, #tpu.memory_space<smem>>
    %492 = vector.broadcast %491 : f32 to vector<1x256xf32>
    %493 = arith.mulf %490, %492 : vector<1x256xf32>
    %494 = arith.addf %489, %493 : vector<1x256xf32>
    %c1_177 = arith.constant 1 : index
    %c83_178 = arith.constant 83 : index
    %495 = vector.load %arg5[%c1_177, %c83_178] : memref<2x435xf32, #tpu.memory_space<vmem>>, vector<1x256xf32>
    %c55 = arith.constant 55 : index
    %496 = memref.load %arg1[%c55] : memref<98xf32, #tpu.memory_space<smem>>
    %497 = vector.broadcast %496 : f32 to vector<1x256xf32>
    %498 = arith.mulf %495, %497 : vector<1x256xf32>
    %499 = arith.addf %494, %498 : vector<1x256xf32>
    %c1_179 = arith.constant 1 : index
    %c99_180 = arith.constant 99 : index
    %500 = vector.load %arg5[%c1_179, %c99_180] : memref<2x435xf32, #tpu.memory_space<vmem>>, vector<1x256xf32>
    %c62 = arith.constant 62 : index
    %501 = memref.load %arg1[%c62] : memref<98xf32, #tpu.memory_space<smem>>
    %502 = vector.broadcast %501 : f32 to vector<1x256xf32>
    %503 = arith.mulf %500, %502 : vector<1x256xf32>
    %504 = arith.addf %499, %503 : vector<1x256xf32>
    %c1_181 = arith.constant 1 : index
    %c115_182 = arith.constant 115 : index
    %505 = vector.load %arg5[%c1_181, %c115_182] : memref<2x435xf32, #tpu.memory_space<vmem>>, vector<1x256xf32>
    %c69 = arith.constant 69 : index
    %506 = memref.load %arg1[%c69] : memref<98xf32, #tpu.memory_space<smem>>
    %507 = vector.broadcast %506 : f32 to vector<1x256xf32>
    %508 = arith.mulf %505, %507 : vector<1x256xf32>
    %509 = arith.addf %504, %508 : vector<1x256xf32>
    %c1_183 = arith.constant 1 : index
    %c131_184 = arith.constant 131 : index
    %510 = vector.load %arg5[%c1_183, %c131_184] : memref<2x435xf32, #tpu.memory_space<vmem>>, vector<1x256xf32>
    %c76 = arith.constant 76 : index
    %511 = memref.load %arg1[%c76] : memref<98xf32, #tpu.memory_space<smem>>
    %512 = vector.broadcast %511 : f32 to vector<1x256xf32>
    %513 = arith.mulf %510, %512 : vector<1x256xf32>
    %514 = arith.addf %509, %513 : vector<1x256xf32>
    %c1_185 = arith.constant 1 : index
    %c147_186 = arith.constant 147 : index
    %515 = vector.load %arg5[%c1_185, %c147_186] : memref<2x435xf32, #tpu.memory_space<vmem>>, vector<1x256xf32>
    %c83_187 = arith.constant 83 : index
    %516 = memref.load %arg1[%c83_187] : memref<98xf32, #tpu.memory_space<smem>>
    %517 = vector.broadcast %516 : f32 to vector<1x256xf32>
    %518 = arith.mulf %515, %517 : vector<1x256xf32>
    %519 = arith.addf %514, %518 : vector<1x256xf32>
    %c1_188 = arith.constant 1 : index
    %c163_189 = arith.constant 163 : index
    %520 = vector.load %arg5[%c1_188, %c163_189] : memref<2x435xf32, #tpu.memory_space<vmem>>, vector<1x256xf32>
    %c90 = arith.constant 90 : index
    %521 = memref.load %arg1[%c90] : memref<98xf32, #tpu.memory_space<smem>>
    %522 = vector.broadcast %521 : f32 to vector<1x256xf32>
    %523 = arith.mulf %520, %522 : vector<1x256xf32>
    %524 = arith.addf %519, %523 : vector<1x256xf32>
    %c1_190 = arith.constant 1 : index
    %c179_191 = arith.constant 179 : index
    %525 = vector.load %arg5[%c1_190, %c179_191] : memref<2x435xf32, #tpu.memory_space<vmem>>, vector<1x256xf32>
    %c97_192 = arith.constant 97 : index
    %526 = memref.load %arg1[%c97_192] : memref<98xf32, #tpu.memory_space<smem>>
    %527 = vector.broadcast %526 : f32 to vector<1x256xf32>
    %528 = arith.mulf %525, %527 : vector<1x256xf32>
    %529 = arith.addf %524, %528 : vector<1x256xf32>
    %c6_193 = arith.constant 6 : index
    %c0_194 = arith.constant 0 : index
    %530 = vector.load %arg2[%c6_193, %c0_194] : memref<7x256xf32, #tpu.memory_space<vmem>>, vector<1x256xf32>
    %531 = arith.mulf %529, %530 : vector<1x256xf32>
    %532 = arith.addf %458, %531 : vector<1x256xf32>
    %533 = arith.negf %532 : vector<1x256xf32>
    %534 = math.exp %533 : vector<1x256xf32>
    %cst_195 = arith.constant 1.000000e+00 : f32
    %535 = vector.broadcast %cst_195 : f32 to vector<1x256xf32>
    %536 = arith.addf %535, %534 : vector<1x256xf32>
    %537 = arith.divf %535, %536 : vector<1x256xf32>
    %538 = vector.shape_cast %537 : vector<1x256xf32> to vector<1x256xf32>
    %539 = vector.broadcast %538 : vector<1x256xf32> to vector<4x256xf32>
    %c0_i32 = arith.constant 0 : i32
    %c4_i32 = arith.constant 4 : i32
    %540 = arith.muli %c0_i32, %c4_i32 : i32
    %541 = tpu.assume_multiple %540, 4 : i32
    %c0_196 = arith.constant 0 : index
    %542 = arith.index_cast %541 : i32 to index
    %c0_197 = arith.constant 0 : index
    %543 = vector.load %arg3[%c0_196, %542, %c0_197] : memref<1x4x256xf32, #tpu.memory_space<vmem>>, vector<1x4x256xf32>
    %544 = vector.shape_cast %543 : vector<1x4x256xf32> to vector<4x256xf32>
    %545 = arith.mulf %544, %539 : vector<4x256xf32>
    %c0_198 = arith.constant 0 : index
    %546 = arith.index_cast %541 : i32 to index
    %c0_199 = arith.constant 0 : index
    %547 = vector.load %arg4[%c0_198, %546, %c0_199] : memref<1x4x256xf32, #tpu.memory_space<vmem>>, vector<1x4x256xf32>
    %548 = vector.shape_cast %547 : vector<1x4x256xf32> to vector<4x256xf32>
    %549 = vector.shape_cast %545 : vector<4x256xf32> to vector<1x4x256xf32>
    tpu.vector_store %arg4[%c0_198, %546, %c0_199], %549 {strides = array<i32>} : memref<1x4x256xf32, #tpu.memory_space<vmem>>, vector<1x4x256xf32>,
    %c1_i32 = arith.constant 1 : i32
    return
  }
  func.func @transform_0(%arg0: i32) -> i32 {
    %c0_i32 = arith.constant 0 : i32
    %c0_i32_0 = arith.constant 0 : i32
    return %c0_i32 : i32
  }
  func.func @transform_1(%arg0: i32) -> (i32, i32) {
    %c0_i32 = arith.constant 0 : i32
    %c0_i32_0 = arith.constant 0 : i32
    %c0_i32_1 = arith.constant 0 : i32
    return %c0_i32, %c0_i32_0 : i32, i32
  }
  func.func @transform_2(%arg0: i32) -> (i32, i32, i32) {
    %c0_i32 = arith.constant 0 : i32
    %c0_i32_0 = arith.constant 0 : i32
    %c0_i32_1 = arith.constant 0 : i32
    return %arg0, %c0_i32, %c0_i32_0 : i32, i32, i32
  }
  func.func @transform_3(%arg0: i32) -> (i32, i32, i32) {
    %c0_i32 = arith.constant 0 : i32
    %c0_i32_0 = arith.constant 0 : i32
    %c0_i32_1 = arith.constant 0 : i32
    return %arg0, %c0_i32, %c0_i32_0 : i32, i32, i32
  }
}

</mosaic_0001>

<llo_original>
// kernel: tpu_custom_call.1
$region0: #{tpu_custom_call.1}
  #allocation0 [shape = 'u32[]', space=smem, size = 0x4, offset = 0x4, fixed_abs, tag = 'smem constant byte address 0x4 - core index']
  #allocation1 [shape = 'u32[72,128]{1,0:T(1,128)}', space=vmem, size = 0x9000, scoped, tag = 'internal scratch']
  #allocation2 [shape = 'f32[2,435]{1,0:T(2,128)}', space=vmem, size = 0x1000, scoped, tag = 'scratch operand']
  %s0 = inlined_call_operand.hbm [shape: f32[98], index: 0, kind: input, shape index: {}]
  %s1 = inlined_call_operand.hbm [shape: f32[7,256], index: 1, kind: input, shape index: {}]
  %s2 = inlined_call_operand.hbm [shape: f32[2,4,256], index: 2, kind: input, shape index: {}]
  %s3 = inlined_call_operand.hbm [shape: f32[2,4,256], index: 3, kind: output, shape index: {}]
  %s4 = sld [smem:[#allocation0]]
  $region57: #{tpu_custom_call.1} parent=0
    _
  %s6 = ssub.s32 1, %s4
  %s7 = scalar_select 0, %s6, %s4
  $region1: #{tpu_custom_call.1} parent=0
    #allocation3 [shape = 'u8[512]{0}', space=smem, size = 0x200, scoped, tag = 'input window, operand 0, single buffered']
    #allocation4 [shape = 's32[2]{0}', space=sflag, size = 0x8, scoped, tag = 'scoped memory for tpu_custom_call.1']
    #allocation5 [shape = 's32[2]{0}', space=sflag, size = 0x8, scoped, tag = 'scoped memory for tpu_custom_call.1']
    #allocation6 [shape = 's32[2]{0}', space=sflag, size = 0x8, scoped, tag = 'scoped memory for tpu_custom_call.1']
    #allocation7 [shape = 'u8[8192]{0}', space=vmem, size = 0x2000, scoped, tag = 'input window, operand 1, single buffered']
    #allocation8 [shape = 'u8[8192]{0}', space=vmem, size = 0x2000, scoped, tag = 'input window, operand 2']
    #allocation9 [shape = 's32[2]{0}', space=sflag, size = 0x8, scoped, tag = 'scoped memory for tpu_custom_call.1']
    #allocation10 [shape = 'u8[8192]{0}', space=vmem, size = 0x2000, scoped, tag = 'output window, operand 0']
    %8 = vsyncpa [#allocation6], 0
    %9 = vsyncpa [#allocation4], 0
    %10 = vsyncpa [#allocation9], 0
    %s11 = scalar_lea.sflag [#allocation9], 1
    %12 = vsyncpa %s11, 0
    %13 = vsyncpa [#allocation5], 0
    %s14 = scalar_lea.sflag [#allocation5], 1
    %15 = vsyncpa %s14, 0
    loop: start=0, step=1, limit=4
    $region2: #{tpu_custom_call.1} parent=1 // loop_pre_header
      _
    $region3: #{tpu_custom_call.1} parent=1 // loop_header
      %s17 = sphi 0, %s21
      %p18 = scmp.ge.s32.totalorder %s17, 4
      %s25 = sphi 0, %s25
      %s27 = sphi 0, %s25
      %s28 = sphi 0, %s27
      %s42 = sphi 0, %s28
      %s46 = sphi 0, %s46
      %s48 = sphi 0, %s46
      %s49 = sphi 0, %s48
      %s63 = sphi 0, %s49
      %s69 = sphi 0, %s71
      %s72 = sphi 0, %s69
      %s73 = sphi 0, %s72
      %s89 = sphi 0, %s73
      %s95 = sphi 0, %s97
      %s98 = sphi 0, %s95
      %s99 = sphi 0, %s98
      %s115 = sphi 0, %s99
    $region4: #{tpu_custom_call.1} parent=1 // loop_header_branch
      %20 = sbr.rel (%p18) target = $region8
    $region5: #{tpu_custom_call.1} parent=1 // loop_body
      %s22 = ssub.s32 %s17, 1
      %s23 = ssub.s32 %s17, 2
      %s24 = sadd.s32 %s17, 1
      %s26 = sadd.s32 %s25, 1
      %p29 = scmp.eq.s32.totalorder %s17, 1
      %p30 = scmp.ne.s32.totalorder %s25, %s27
      %p31 = scmp.eq.s32.totalorder %s17, 0
      %p32 = por %p30, %p31
      %p33 = scmp.ne.s32.totalorder %s25, %s27
      %p34 = scmp.eq.s32.totalorder %s22, 1
      %p35 = por %p33, %p34
      %p36 = scmp.ne.s32.totalorder %s27, %s28
      %p37 = scmp.eq.s32.totalorder %s22, 0
      %p38 = por %p36, %p37
      %p39 = scmp.ne.s32.totalorder %s27, %s28
      %p40 = scmp.eq.s32.totalorder %s23, 1
      %p41 = por %p39, %p40
      %p43 = scmp.ne.s32.totalorder %s28, %s42
      %p44 = scmp.eq.s32.totalorder %s23, 0
      %p45 = por %p43, %p44
      %s47 = sadd.s32 %s46, 1
      %p50 = scmp.eq.s32.totalorder %s17, 1
      %p51 = scmp.ne.s32.totalorder %s46, %s48
      %p52 = scmp.eq.s32.totalorder %s17, 0
      %p53 = por %p51, %p52
      %p54 = scmp.ne.s32.totalorder %s46, %s48
      %p55 = scmp.eq.s32.totalorder %s22, 1
      %p56 = por %p54, %p55
      %p57 = scmp.ne.s32.totalorder %s48, %s49
      %p58 = scmp.eq.s32.totalorder %s22, 0
      %p59 = por %p57, %p58
      %p60 = scmp.ne.s32.totalorder %s48, %s49
      %p61 = scmp.eq.s32.totalorder %s23, 1
      %p62 = por %p60, %p61
      %p64 = scmp.ne.s32.totalorder %s49, %s63
      %p65 = scmp.eq.s32.totalorder %s23, 0
      %p66 = por %p64, %p65
      %s67 = ssub.s32 %s17, %s24
      %p68 = scmp.eq.s32.totalorder %s67, 0
      %s70 = sadd.s32 %s69, 1
      %s71 = scalar_select %p68, %s69, %s70
      %p74 = pneg %p68
      %p75 = scmp.eq.s32.totalorder %s17, 1
      %p76 = por %p74, %p75
      %p77 = scmp.ne.s32.totalorder %s69, %s72
      %p78 = scmp.eq.s32.totalorder %s17, 0
      %p79 = por %p77, %p78
      %p80 = scmp.ne.s32.totalorder %s69, %s72
      %p81 = scmp.eq.s32.totalorder %s22, 1
      %p82 = por %p80, %p81
      %p83 = scmp.ne.s32.totalorder %s72, %s73
      %p84 = scmp.eq.s32.totalorder %s22, 0
      %p85 = por %p83, %p84
      %p86 = scmp.ne.s32.totalorder %s72, %s73
      %p87 = scmp.eq.s32.totalorder %s23, 1
      %p88 = por %p86, %p87
      %p90 = scmp.ne.s32.totalorder %s73, %s89
      %p91 = scmp.eq.s32.totalorder %s23, 0
      %p92 = por %p90, %p91
      %s93 = ssub.s32 %s17, %s24
      %p94 = scmp.eq.s32.totalorder %s93, 0
      %s96 = sadd.s32 %s95, 1
      %s97 = scalar_select %p94, %s95, %s96
      %p100 = pneg %p94
      %p101 = scmp.eq.s32.totalorder %s17, 1
      %p102 = por %p100, %p101
      %p103 = scmp.ne.s32.totalorder %s95, %s98
      %p104 = scmp.eq.s32.totalorder %s17, 0
      %p105 = por %p103, %p104
      %p106 = scmp.ne.s32.totalorder %s95, %s98
      %p107 = scmp.eq.s32.totalorder %s22, 1
      %p108 = por %p106, %p107
      %p109 = scmp.ne.s32.totalorder %s98, %s99
      %p110 = scmp.eq.s32.totalorder %s22, 0
      %p111 = por %p109, %p110
      %p112 = scmp.ne.s32.totalorder %s98, %s99
      %p113 = scmp.eq.s32.totalorder %s23, 1
      %p114 = por %p112, %p113
      %p116 = scmp.ne.s32.totalorder %s99, %s115
      %p117 = scmp.eq.s32.totalorder %s23, 0
      %p118 = por %p116, %p117
      %p119 = scmp.le.s32.totalorder 1, %s17
      %p120 = scmp.lt.s32.totalorder %s17, 3
      %p121 = pnand %p119, %p120
      %p122 = pneg %p121
      // Predicated region
      $region9: #{tpu_custom_call.1} parent=5 // pred_check
        _
      $region10: #{tpu_custom_call.1} parent=5 // pred_check_branch
        %124 = sbr.rel (%p121) target = $region12
      $region11: #{tpu_custom_call.1} parent=5 // pred_region
        %s125 = ssub.s32 %s17, 1
        // Predicated region
        $region13: #{tpu_custom_call.1} parent=11 // pred_check
          %p126 = pneg %p38
        $region14: #{tpu_custom_call.1} parent=11 // pred_check_branch
          %128 = sbr.rel (%p126) target = $region16
        $region15: #{tpu_custom_call.1} parent=11 // pred_region
          %130 = vsyncadd [#allocation6], 0
          %s132 = sshll.u32 %s0, 4
          %s133 = int_to_ptr.hbm [resolvable:$true] %s132
          %135 = dma.hbm_to_smem %s133, 16, [#allocation3], [#allocation6]
        $region16: #{tpu_custom_call.1} parent=11 // pred_fallthru
          _
        // Predicated region
        $region17: #{tpu_custom_call.1} parent=11 // pred_check
          %p136 = pneg %p59
        $region18: #{tpu_custom_call.1} parent=11 // pred_check_branch
          %138 = sbr.rel (%p136) target = $region20
        $region19: #{tpu_custom_call.1} parent=11 // pred_region
          %140 = vsyncadd [#allocation4], 0
          %s142 = sshll.u32 %s1, 4
          %s143 = int_to_ptr.hbm [resolvable:$true] %s142
          %s144 = sshll.u32 [#allocation7], 4
          %s145 = int_to_ptr.vmem [resolvable:$true] %s144
          %147 = dma.hbm_to_vmem [thread:$0]  %s143, 256, %s145, [#allocation4]
        $region20: #{tpu_custom_call.1} parent=11 // pred_fallthru
          _
      $region12: #{tpu_custom_call.1} parent=5 // pred_fallthru
        _
      %p148 = scmp.lt.s32.totalorder %s17, 2
      // Predicated region
      $region21: #{tpu_custom_call.1} parent=5 // pred_check
        %p149 = pneg %p148
      $region22: #{tpu_custom_call.1} parent=5 // pred_check_branch
        %151 = sbr.rel (%p149) target = $region24
      $region23: #{tpu_custom_call.1} parent=5 // pred_region
        // Predicated region
        $region25: #{tpu_custom_call.1} parent=23 // pred_check
          %p152 = pneg %p79
        $region26: #{tpu_custom_call.1} parent=23 // pred_check_branch
          %154 = sbr.rel (%p152) target = $region28
        $region27: #{tpu_custom_call.1} parent=23 // pred_region
          %s155 = sand.u32 %s69, 1
          %s156 = scalar_lea.sflag [#allocation9], %s155
          %s157 = sand.u32 %s69, 1
          %s158 = smul.addr %s157, 8
          %s159 = scalar_lea.vmem [#allocation8], %s158
          %161 = vsyncadd %s156, 0
          %s162 = smul.addr %s17, 2
          %s163 = smul.addr %s162, 4
          %s164 = scalar_lea.hbm %s2, %s163
          %s166 = sshll.u32 %s164, 4
          %s167 = int_to_ptr.hbm [resolvable:$true] %s166
          %s168 = sshll.u32 %s159, 4
          %s169 = int_to_ptr.vmem [resolvable:$true] %s168
          %171 = dma.hbm_to_vmem [thread:$0]  %s167, 128, %s169, %s156
        $region28: #{tpu_custom_call.1} parent=23 // pred_fallthru
          _
      $region24: #{tpu_custom_call.1} parent=5 // pred_fallthru
        _
      %p172 = scmp.le.s32.totalorder 1, %s17
      %p173 = scmp.lt.s32.totalorder %s17, 3
      %p174 = pnand %p172, %p173
      %p175 = pneg %p174
      // Predicated region
      $region29: #{tpu_custom_call.1} parent=5 // pred_check
        _
      $region30: #{tpu_custom_call.1} parent=5 // pred_check_branch
        %177 = sbr.rel (%p174) target = $region32
      $region31: #{tpu_custom_call.1} parent=5 // pred_region
        %s178 = ssub.s32 %s17, 1
        // Predicated region
        $region33: #{tpu_custom_call.1} parent=31 // pred_check
          %p179 = pneg %p38
        $region34: #{tpu_custom_call.1} parent=31 // pred_check_branch
          %181 = sbr.rel (%p179) target = $region36
        $region35: #{tpu_custom_call.1} parent=31 // pred_region
          %183 = dma.done [#allocation6], 16
        $region36: #{tpu_custom_call.1} parent=31 // pred_fallthru
          _
        // Predicated region
        $region37: #{tpu_custom_call.1} parent=31 // pred_check
          %p184 = pneg %p59
        $region38: #{tpu_custom_call.1} parent=31 // pred_check_branch
          %186 = sbr.rel (%p184) target = $region40
        $region39: #{tpu_custom_call.1} parent=31 // pred_region
          %188 = dma.done [#allocation4], 256
        $region40: #{tpu_custom_call.1} parent=31 // pred_fallthru
          _
        %s189 = sand.u32 %s72, 1
        %s190 = scalar_lea.sflag [#allocation9], %s189
        %s191 = sand.u32 %s72, 1
        %s192 = smul.addr %s191, 8
        %s193 = scalar_lea.vmem [#allocation8], %s192
        // Predicated region
        $region41: #{tpu_custom_call.1} parent=31 // pred_check
          %p194 = pneg %p85
        $region42: #{tpu_custom_call.1} parent=31 // pred_check_branch
          %196 = sbr.rel (%p194) target = $region44
        $region43: #{tpu_custom_call.1} parent=31 // pred_region
          %198 = dma.done %s190, 128
        $region44: #{tpu_custom_call.1} parent=31 // pred_fallthru
          _
        %199 = sfence
        %p200 = pneg %p38
        %p201 = pneg %p35
        %p202 = pneg %p59
        %p203 = pneg %p56
        %s204 = sand.u32 %s72, 1
        %s205 = scalar_lea.sflag [#allocation9], %s204
        %s206 = sand.u32 %s72, 1
        %s207 = smul.addr %s206, 8
        %s208 = scalar_lea.vmem [#allocation8], %s207
        %p209 = pneg %p85
        %p210 = pneg %p82
        %p211 = pneg %p111
        %p212 = pneg %p108
        %s213 = sand.u32 %s98, 1
        %s214 = scalar_lea.sflag [#allocation5], %s213
        %s215 = sand.u32 %s98, 1
        %s216 = smul.addr %s215, 8
        %s217 = scalar_lea.vmem [#allocation10], %s216
        %218 = vst [vmem:[#allocation2] sm:$0x3] 0.0
        %vm219 = vcmask 410624
        %220 = vst.msk [vmem:[#allocation2 + $0x6] sm:$0x3] %vm219, 0.0
        %v221 = vld [vmem:[%s193] sm:$0xff]
        %223 = vst [vmem:[#allocation1] ss:$2 sm:$0xff] %v221
        %v224 = vld.sshfl [vmem:[#allocation1] sm:$0xff pattern:$0x75316420]
        %v225 = vld.sshfl [vmem:[#allocation1 + $0x8] sm:$0xff pattern:$0x75316420]
        %vm228 = vcmask 1043456
        %v229 = vsel %vm228, %v224, -inf
        %v230 = vrot.slane %v229, 4
        %v231 = vmax.f32 %v229, %v230
        %v232 = vrot.slane %v231, 2
        %v233 = vmax.f32 %v231, %v232
        %v234 = vrot.slane %v233, 1
        %v235 = vmax.f32 %v233, %v234
        %v236 = vsel %vm228, %v225, -inf
        %v237 = vrot.slane %v236, 4
        %v238 = vmax.f32 %v236, %v237
        %v239 = vrot.slane %v238, 2
        %v240 = vmax.f32 %v238, %v239
        %v241 = vrot.slane %v240, 1
        %v242 = vmax.f32 %v240, %v241
        %243 = vst [vmem:[#allocation1] ss:$2 sm:$0xff] %v221
        %v244 = vld.sshfl [vmem:[#allocation1] sm:$0xff pattern:$0x75316420]
        %v245 = vld.sshfl [vmem:[#allocation1 + $0x8] sm:$0xff pattern:$0x75316420]
        %v248 = vsel %vm228, %v244, 0.0
        %v249 = vrot.slane %v248, 4
        %v250 = vadd.f32 %v248, %v249
        %v251 = vrot.slane %v250, 2
        %v252 = vadd.f32 %v250, %v251
        %v253 = vrot.slane %v252, 1
        %v254 = vadd.f32 %v252, %v253
        %v255 = vsel %vm228, %v245, 0.0
        %v256 = vrot.slane %v255, 4
        %v257 = vadd.f32 %v255, %v256
        %v258 = vrot.slane %v257, 2
        %v259 = vadd.f32 %v257, %v258
        %v260 = vrot.slane %v259, 1
        %v261 = vadd.f32 %v259, %v260
        %v264 = vrot.slane %v242, 7
        %vm265 = vcmask 1040384
        %v266 = vsel %vm265, %v235, %v264
        %v268 = vlaneseq
        %vm269 = vcmp.ge.s32.totalorder %v268, 0
        %vm270 = vcmp.lt.s32.totalorder %v268, 256
        %vm271 = vmand %vm269, %vm270
        %s272 = scalar_lea.vmem [#allocation2], 2
        %273 = vst.msk [vmem:[%s272] ss:$2 sm:$0x3] %vm271, %v266
        %v274 = vmul.f32 %v254, 0.25
        %v275 = vmul.f32 %v261, 0.25
        %v278 = vrot.slane %v275, 7
        %v279 = vsel %vm265, %v274, %v278
        %s281 = scalar_lea.vmem [#allocation2], 3
        %282 = vst.msk [vmem:[%s281] ss:$2 sm:$0x3] %vm271, %v279
        %v283 = vld [vmem:[#allocation2] ss:$2 sm:$0x7]
        %s284 = sld [smem:[#allocation3]]
        %v285 = vstv %s284
        %v286 = vmul.f32 %v283, %v285
        %v287 = vadd.f32 %v286, 0.0
        %s288 = sld [smem:[#allocation3 + $0x7]]
        %v289 = vstv %s288
        %v290 = vmul.f32 %v283, %v289
        %292 = vrot.lane.b32.xlu0 %v290, 112
        %v293 = vpop.permute.xlu0 %292
        %v294 = vrot.slane %v293, 1
        %vm295 = vcmask 916480
        %v296 = vsel %vm295, %v293, %v294
        %v298 = vadd.f32 %v287, %v296
        %s299 = sld [smem:[#allocation3 + $0xe]]
        %v300 = vstv %s299
        %v301 = vmul.f32 %v283, %v300
        %303 = vrot.lane.b32.xlu0 %v301, 96
        %v304 = vpop.permute.xlu0 %303
        %v305 = vrot.slane %v304, 1
        %vm306 = vcmask 785408
        %v307 = vsel %vm306, %v304, %v305
        %v309 = vadd.f32 %v298, %v307
        %s310 = sld [smem:[#allocation3 + $0x15]]
        %v311 = vstv %s310
        %v312 = vmul.f32 %v283, %v311
        %314 = vrot.lane.b32.xlu0 %v312, 80
        %v315 = vpop.permute.xlu0 %314
        %v316 = vrot.slane %v315, 1
        %vm317 = vcmask 654336
        %v318 = vsel %vm317, %v315, %v316
        %v320 = vadd.f32 %v309, %v318
        %v321 = vld [vmem:[%s272] ss:$2 sm:$0x7]
        %s322 = sld [smem:[#allocation3 + $0x1c]]
        %v323 = vstv %s322
        %v324 = vmul.f32 %v321, %v323
        %326 = vrot.lane.b32.xlu0 %v324, 64
        %v327 = vpop.permute.xlu0 %326
        %v328 = vrot.slane %v327, 7
        %vm329 = vcmask 523264
        %v330 = vsel %vm329, %v328, %v327
        %v332 = vadd.f32 %v320, %v330
        %s333 = sld [smem:[#allocation3 + $0x23]]
        %v334 = vstv %s333
        %v335 = vmul.f32 %v321, %v334
        %337 = vrot.lane.b32.xlu0 %v335, 48
        %v338 = vpop.permute.xlu0 %337
        %v339 = vrot.slane %v338, 7
        %vm340 = vcmask 392192
        %v341 = vsel %vm340, %v339, %v338
        %v343 = vadd.f32 %v332, %v341
        %s344 = sld [smem:[#allocation3 + $0x2a]]
        %v345 = vstv %s344
        %v346 = vmul.f32 %v321, %v345
        %348 = vrot.lane.b32.xlu0 %v346, 32
        %v349 = vpop.permute.xlu0 %348
        %v350 = vrot.slane %v349, 7
        %vm351 = vcmask 261120
        %v352 = vsel %vm351, %v350, %v349
        %v354 = vadd.f32 %v343, %v352
        %s355 = scalar_lea.vmem [#allocation2], 1
        %v356 = vld [vmem:[%s355] ss:$2 sm:$0x7]
        %s357 = sld [smem:[#allocation3 + $0x31]]
        %v358 = vstv %s357
        %v359 = vmul.f32 %v356, %v358
        %v360 = vadd.f32 %v354, %v359
        %s361 = sld [smem:[#allocation3 + $0x38]]
        %v362 = vstv %s361
        %v363 = vmul.f32 %v356, %v362
        %365 = vrot.lane.b32.xlu0 %v363, 112
        %v366 = vpop.permute.xlu0 %365
        %v367 = vrot.slane %v366, 1
        %v368 = vsel %vm295, %v366, %v367
        %v370 = vadd.f32 %v360, %v368
        %s371 = sld [smem:[#allocation3 + $0x3f]]
        %v372 = vstv %s371
        %v373 = vmul.f32 %v356, %v372
        %375 = vrot.lane.b32.xlu0 %v373, 96
        %v376 = vpop.permute.xlu0 %375
        %v377 = vrot.slane %v376, 1
        %v378 = vsel %vm306, %v376, %v377
        %v380 = vadd.f32 %v370, %v378
        %s381 = sld [smem:[#allocation3 + $0x46]]
        %v382 = vstv %s381
        %v383 = vmul.f32 %v356, %v382
        %385 = vrot.lane.b32.xlu0 %v383, 80
        %v386 = vpop.permute.xlu0 %385
        %v387 = vrot.slane %v386, 1
        %v388 = vsel %vm317, %v386, %v387
        %v390 = vadd.f32 %v380, %v388
        %v391 = vld [vmem:[%s281] ss:$2 sm:$0x7]
        %s392 = sld [smem:[#allocation3 + $0x4d]]
        %v393 = vstv %s392
        %v394 = vmul.f32 %v391, %v393
        %396 = vrot.lane.b32.xlu0 %v394, 64
        %v397 = vpop.permute.xlu0 %396
        %v398 = vrot.slane %v397, 7
        %v399 = vsel %vm329, %v398, %v397
        %v401 = vadd.f32 %v390, %v399
        %s402 = sld [smem:[#allocation3 + $0x54]]
        %v403 = vstv %s402
        %v404 = vmul.f32 %v391, %v403
        %406 = vrot.lane.b32.xlu0 %v404, 48
        %v407 = vpop.permute.xlu0 %406
        %v408 = vrot.slane %v407, 7
        %v409 = vsel %vm340, %v408, %v407
        %v411 = vadd.f32 %v401, %v409
        %s412 = sld [smem:[#allocation3 + $0x5b]]
        %v413 = vstv %s412
        %v414 = vmul.f32 %v391, %v413
        %416 = vrot.lane.b32.xlu0 %v414, 32
        %v417 = vpop.permute.xlu0 %416
        %v418 = vrot.slane %v417, 7
        %v419 = vsel %vm351, %v418, %v417
        %v421 = vadd.f32 %v411, %v419
        %v422 = vld [vmem:[#allocation7] ss:$8 sm:$0x3]
        %424 = vrot.lane.b32.xlu0 %v422, 77
        %v425 = vpop.permute.xlu0 %424
        %v426 = vrot.slane %v425, 7
        %vm427 = vcmask 629760
        %v428 = vsel %vm427, %v426, %v425
        %v430 = vmul.f32 %v421, %v428
        %v431 = vadd.f32 %v430, 0.0
        %s432 = sld [smem:[#allocation3 + $0x1]]
        %v433 = vstv %s432
        %v434 = vmul.f32 %v283, %v433
        %v435 = vadd.f32 %v434, 0.0
        %s436 = sld [smem:[#allocation3 + $0x8]]
        %v437 = vstv %s436
        %v438 = vmul.f32 %v283, %v437
        %440 = vrot.lane.b32.xlu0 %v438, 112
        %v441 = vpop.permute.xlu0 %440
        %v442 = vrot.slane %v441, 1
        %v443 = vsel %vm295, %v441, %v442
        %v445 = vadd.f32 %v435, %v443
        %s446 = sld [smem:[#allocation3 + $0xf]]
        %v447 = vstv %s446
        %v448 = vmul.f32 %v283, %v447
        %450 = vrot.lane.b32.xlu0 %v448, 96
        %v451 = vpop.permute.xlu0 %450
        %v452 = vrot.slane %v451, 1
        %v453 = vsel %vm306, %v451, %v452
        %v455 = vadd.f32 %v445, %v453
        %s456 = sld [smem:[#allocation3 + $0x16]]
        %v457 = vstv %s456
        %v458 = vmul.f32 %v283, %v457
        %460 = vrot.lane.b32.xlu0 %v458, 80
        %v461 = vpop.permute.xlu0 %460
        %v462 = vrot.slane %v461, 1
        %v463 = vsel %vm317, %v461, %v462
        %v465 = vadd.f32 %v455, %v463
        %s466 = sld [smem:[#allocation3 + $0x1d]]
        %v467 = vstv %s466
        %v468 = vmul.f32 %v321, %v467
        %470 = vrot.lane.b32.xlu0 %v468, 64
        %v471 = vpop.permute.xlu0 %470
        %v472 = vrot.slane %v471, 7
        %v473 = vsel %vm329, %v472, %v471
        %v475 = vadd.f32 %v465, %v473
        %s476 = sld [smem:[#allocation3 + $0x24]]
        %v477 = vstv %s476
        %v478 = vmul.f32 %v321, %v477
        %480 = vrot.lane.b32.xlu0 %v478, 48
        %v481 = vpop.permute.xlu0 %480
        %v482 = vrot.slane %v481, 7
        %v483 = vsel %vm340, %v482, %v481
        %v485 = vadd.f32 %v475, %v483
        %s486 = sld [smem:[#allocation3 + $0x2b]]
        %v487 = vstv %s486
        %v488 = vmul.f32 %v321, %v487
        %490 = vrot.lane.b32.xlu0 %v488, 32
        %v491 = vpop.permute.xlu0 %490
        %v492 = vrot.slane %v491, 7
        %v493 = vsel %vm351, %v492, %v491
        %v495 = vadd.f32 %v485, %v493
        %s496 = sld [smem:[#allocation3 + $0x32]]
        %v497 = vstv %s496
        %v498 = vmul.f32 %v356, %v497
        %v499 = vadd.f32 %v495, %v498
        %s500 = sld [smem:[#allocation3 + $0x39]]
        %v501 = vstv %s500
        %v502 = vmul.f32 %v356, %v501
        %504 = vrot.lane.b32.xlu0 %v502, 112
        %v505 = vpop.permute.xlu0 %504
        %v506 = vrot.slane %v505, 1
        %v507 = vsel %vm295, %v505, %v506
        %v509 = vadd.f32 %v499, %v507
        %s510 = sld [smem:[#allocation3 + $0x40]]
        %v511 = vstv %s510
        %v512 = vmul.f32 %v356, %v511
        %514 = vrot.lane.b32.xlu0 %v512, 96
        %v515 = vpop.permute.xlu0 %514
        %v516 = vrot.slane %v515, 1
        %v517 = vsel %vm306, %v515, %v516
        %v519 = vadd.f32 %v509, %v517
        %s520 = sld [smem:[#allocation3 + $0x47]]
        %v521 = vstv %s520
        %v522 = vmul.f32 %v356, %v521
        %524 = vrot.lane.b32.xlu0 %v522, 80
        %v525 = vpop.permute.xlu0 %524
        %v526 = vrot.slane %v525, 1
        %v527 = vsel %vm317, %v525, %v526
        %v529 = vadd.f32 %v519, %v527
        %s530 = sld [smem:[#allocation3 + $0x4e]]
        %v531 = vstv %s530
        %v532 = vmul.f32 %v391, %v531
        %534 = vrot.lane.b32.xlu0 %v532, 64
        %v535 = vpop.permute.xlu0 %534
        %v536 = vrot.slane %v535, 7
        %v537 = vsel %vm329, %v536, %v535
        %v539 = vadd.f32 %v529, %v537
        %s540 = sld [smem:[#allocation3 + $0x55]]
        %v541 = vstv %s540
        %v542 = vmul.f32 %v391, %v541
        %544 = vrot.lane.b32.xlu0 %v542, 48
        %v545 = vpop.permute.xlu0 %544
        %v546 = vrot.slane %v545, 7
        %v547 = vsel %vm340, %v546, %v545
        %v549 = vadd.f32 %v539, %v547
        %s550 = sld [smem:[#allocation3 + $0x5c]]
        %v551 = vstv %s550
        %v552 = vmul.f32 %v391, %v551
        %554 = vrot.lane.b32.xlu0 %v552, 32
        %v555 = vpop.permute.xlu0 %554
        %v556 = vrot.slane %v555, 7
        %v557 = vsel %vm351, %v556, %v555
        %v559 = vadd.f32 %v549, %v557
        %s560 = scalar_lea.vmem [#allocation7], 1
        %v561 = vld [vmem:[%s560] ss:$8 sm:$0x3]
        %563 = vrot.lane.b32.xlu0 %v561, 78
        %v564 = vpop.permute.xlu0 %563
        %v565 = vrot.slane %v564, 7
        %vm566 = vcmask 637952
        %v567 = vsel %vm566, %v565, %v564
        %v569 = vmul.f32 %v559, %v567
        %571 = vrot.lane.b32.xlu0 %v569, 127
        %v572 = vpop.permute.xlu0 %571
        %v573 = vrot.slane %v572, 1
        %vm574 = vcmask 1039360
        %v575 = vsel %vm574, %v572, %v573
        %v577 = vadd.f32 %v431, %v575
        %s578 = sld [smem:[#allocation3 + $0x2]]
        %v579 = vstv %s578
        %v580 = vmul.f32 %v283, %v579
        %v581 = vadd.f32 %v580, 0.0
        %s582 = sld [smem:[#allocation3 + $0x9]]
        %v583 = vstv %s582
        %v584 = vmul.f32 %v283, %v583
        %586 = vrot.lane.b32.xlu0 %v584, 112
        %v587 = vpop.permute.xlu0 %586
        %v588 = vrot.slane %v587, 1
        %v589 = vsel %vm295, %v587, %v588
        %v591 = vadd.f32 %v581, %v589
        %s592 = sld [smem:[#allocation3 + $0x10]]
        %v593 = vstv %s592
        %v594 = vmul.f32 %v283, %v593
        %596 = vrot.lane.b32.xlu0 %v594, 96
        %v597 = vpop.permute.xlu0 %596
        %v598 = vrot.slane %v597, 1
        %v599 = vsel %vm306, %v597, %v598
        %v601 = vadd.f32 %v591, %v599
        %s602 = sld [smem:[#allocation3 + $0x17]]
        %v603 = vstv %s602
        %v604 = vmul.f32 %v283, %v603
        %606 = vrot.lane.b32.xlu0 %v604, 80
        %v607 = vpop.permute.xlu0 %606
        %v608 = vrot.slane %v607, 1
        %v609 = vsel %vm317, %v607, %v608
        %v611 = vadd.f32 %v601, %v609
        %s612 = sld [smem:[#allocation3 + $0x1e]]
        %v613 = vstv %s612
        %v614 = vmul.f32 %v321, %v613
        %616 = vrot.lane.b32.xlu0 %v614, 64
        %v617 = vpop.permute.xlu0 %616
        %v618 = vrot.slane %v617, 7
        %v619 = vsel %vm329, %v618, %v617
        %v621 = vadd.f32 %v611, %v619
        %s622 = sld [smem:[#allocation3 + $0x25]]
        %v623 = vstv %s622
        %v624 = vmul.f32 %v321, %v623
        %626 = vrot.lane.b32.xlu0 %v624, 48
        %v627 = vpop.permute.xlu0 %626
        %v628 = vrot.slane %v627, 7
        %v629 = vsel %vm340, %v628, %v627
        %v631 = vadd.f32 %v621, %v629
        %s632 = sld [smem:[#allocation3 + $0x2c]]
        %v633 = vstv %s632
        %v634 = vmul.f32 %v321, %v633
        %636 = vrot.lane.b32.xlu0 %v634, 32
        %v637 = vpop.permute.xlu0 %636
        %v638 = vrot.slane %v637, 7
        %v639 = vsel %vm351, %v638, %v637
        %v641 = vadd.f32 %v631, %v639
        %s642 = sld [smem:[#allocation3 + $0x33]]
        %v643 = vstv %s642
        %v644 = vmul.f32 %v356, %v643
        %v645 = vadd.f32 %v641, %v644
        %s646 = sld [smem:[#allocation3 + $0x3a]]
        %v647 = vstv %s646
        %v648 = vmul.f32 %v356, %v647
        %650 = vrot.lane.b32.xlu0 %v648, 112
        %v651 = vpop.permute.xlu0 %650
        %v652 = vrot.slane %v651, 1
        %v653 = vsel %vm295, %v651, %v652
        %v655 = vadd.f32 %v645, %v653
        %s656 = sld [smem:[#allocation3 + $0x41]]
        %v657 = vstv %s656
        %v658 = vmul.f32 %v356, %v657
        %660 = vrot.lane.b32.xlu0 %v658, 96
        %v661 = vpop.permute.xlu0 %660
        %v662 = vrot.slane %v661, 1
        %v663 = vsel %vm306, %v661, %v662
        %v665 = vadd.f32 %v655, %v663
        %s666 = sld [smem:[#allocation3 + $0x48]]
        %v667 = vstv %s666
        %v668 = vmul.f32 %v356, %v667
        %670 = vrot.lane.b32.xlu0 %v668, 80
        %v671 = vpop.permute.xlu0 %670
        %v672 = vrot.slane %v671, 1
        %v673 = vsel %vm317, %v671, %v672
        %v675 = vadd.f32 %v665, %v673
        %s676 = sld [smem:[#allocation3 + $0x4f]]
        %v677 = vstv %s676
        %v678 = vmul.f32 %v391, %v677
        %680 = vrot.lane.b32.xlu0 %v678, 64
        %v681 = vpop.permute.xlu0 %680
        %v682 = vrot.slane %v681, 7
        %v683 = vsel %vm329, %v682, %v681
        %v685 = vadd.f32 %v675, %v683
        %s686 = sld [smem:[#allocation3 + $0x56]]
        %v687 = vstv %s686
        %v688 = vmul.f32 %v391, %v687
        %690 = vrot.lane.b32.xlu0 %v688, 48
        %v691 = vpop.permute.xlu0 %690
        %v692 = vrot.slane %v691, 7
        %v693 = vsel %vm340, %v692, %v691
        %v695 = vadd.f32 %v685, %v693
        %s696 = sld [smem:[#allocation3 + $0x5d]]
        %v697 = vstv %s696
        %v698 = vmul.f32 %v391, %v697
        %700 = vrot.lane.b32.xlu0 %v698, 32
        %v701 = vpop.permute.xlu0 %700
        %v702 = vrot.slane %v701, 7
        %v703 = vsel %vm351, %v702, %v701
        %v705 = vadd.f32 %v695, %v703
        %s706 = scalar_lea.vmem [#allocation7], 2
        %v707 = vld [vmem:[%s706] ss:$8 sm:$0x3]
        %709 = vrot.lane.b32.xlu0 %v707, 79
        %v710 = vpop.permute.xlu0 %709
        %v711 = vrot.slane %v710, 7
        %vm712 = vcmask 646144
        %v713 = vsel %vm712, %v711, %v710
        %v715 = vmul.f32 %v705, %v713
        %717 = vrot.lane.b32.xlu0 %v715, 126
        %v718 = vpop.permute.xlu0 %717
        %v719 = vrot.slane %v718, 1
        %vm720 = vcmask 1031168
        %v721 = vsel %vm720, %v718, %v719
        %v723 = vadd.f32 %v577, %v721
        %s724 = sld [smem:[#allocation3 + $0x3]]
        %v725 = vstv %s724
        %v726 = vmul.f32 %v283, %v725
        %v727 = vadd.f32 %v726, 0.0
        %s728 = sld [smem:[#allocation3 + $0xa]]
        %v729 = vstv %s728
        %v730 = vmul.f32 %v283, %v729
        %732 = vrot.lane.b32.xlu0 %v730, 112
        %v733 = vpop.permute.xlu0 %732
        %v734 = vrot.slane %v733, 1
        %v735 = vsel %vm295, %v733, %v734
        %v737 = vadd.f32 %v727, %v735
        %s738 = sld [smem:[#allocation3 + $0x11]]
        %v739 = vstv %s738
        %v740 = vmul.f32 %v283, %v739
        %742 = vrot.lane.b32.xlu0 %v740, 96
        %v743 = vpop.permute.xlu0 %742
        %v744 = vrot.slane %v743, 1
        %v745 = vsel %vm306, %v743, %v744
        %v747 = vadd.f32 %v737, %v745
        %v748 = vld [vmem:[%s272] ss:$2 sm:$0x3]
        %s749 = sld [smem:[#allocation3 + $0x18]]
        %v750 = vstv %s749
        %v751 = vmul.f32 %v748, %v750
        %753 = vrot.lane.b32.xlu0 %v751, 80
        %v754 = vpop.permute.xlu0 %753
        %v755 = vrot.slane %v754, 7
        %v756 = vsel %vm317, %v755, %v754
        %v758 = vadd.f32 %v747, %v756
        %s759 = sld [smem:[#allocation3 + $0x1f]]
        %v760 = vstv %s759
        %v761 = vmul.f32 %v321, %v760
        %763 = vrot.lane.b32.xlu0 %v761, 64
        %v764 = vpop.permute.xlu0 %763
        %v765 = vrot.slane %v764, 7
        %v766 = vsel %vm329, %v765, %v764
        %v768 = vadd.f32 %v758, %v766
        %s769 = sld [smem:[#allocation3 + $0x26]]
        %v770 = vstv %s769
        %v771 = vmul.f32 %v321, %v770
        %773 = vrot.lane.b32.xlu0 %v771, 48
        %v774 = vpop.permute.xlu0 %773
        %v775 = vrot.slane %v774, 7
        %v776 = vsel %vm340, %v775, %v774
        %v778 = vadd.f32 %v768, %v776
        %s779 = sld [smem:[#allocation3 + $0x2d]]
        %v780 = vstv %s779
        %v781 = vmul.f32 %v321, %v780
        %783 = vrot.lane.b32.xlu0 %v781, 32
        %v784 = vpop.permute.xlu0 %783
        %v785 = vrot.slane %v784, 7
        %v786 = vsel %vm351, %v785, %v784
        %v788 = vadd.f32 %v778, %v786
        %s789 = sld [smem:[#allocation3 + $0x34]]
        %v790 = vstv %s789
        %v791 = vmul.f32 %v356, %v790
        %v792 = vadd.f32 %v788, %v791
        %s793 = sld [smem:[#allocation3 + $0x3b]]
        %v794 = vstv %s793
        %v795 = vmul.f32 %v356, %v794
        %797 = vrot.lane.b32.xlu0 %v795, 112
        %v798 = vpop.permute.xlu0 %797
        %v799 = vrot.slane %v798, 1
        %v800 = vsel %vm295, %v798, %v799
        %v802 = vadd.f32 %v792, %v800
        %s803 = sld [smem:[#allocation3 + $0x42]]
        %v804 = vstv %s803
        %v805 = vmul.f32 %v356, %v804
        %807 = vrot.lane.b32.xlu0 %v805, 96
        %v808 = vpop.permute.xlu0 %807
        %v809 = vrot.slane %v808, 1
        %v810 = vsel %vm306, %v808, %v809
        %v812 = vadd.f32 %v802, %v810
        %v813 = vld [vmem:[%s281] ss:$2 sm:$0x3]
        %s814 = sld [smem:[#allocation3 + $0x49]]
        %v815 = vstv %s814
        %v816 = vmul.f32 %v813, %v815
        %818 = vrot.lane.b32.xlu0 %v816, 80
        %v819 = vpop.permute.xlu0 %818
        %v820 = vrot.slane %v819, 7
        %v821 = vsel %vm317, %v820, %v819
        %v823 = vadd.f32 %v812, %v821
        %s824 = sld [smem:[#allocation3 + $0x50]]
        %v825 = vstv %s824
        %v826 = vmul.f32 %v391, %v825
        %828 = vrot.lane.b32.xlu0 %v826, 64
        %v829 = vpop.permute.xlu0 %828
        %v830 = vrot.slane %v829, 7
        %v831 = vsel %vm329, %v830, %v829
        %v833 = vadd.f32 %v823, %v831
        %s834 = sld [smem:[#allocation3 + $0x57]]
        %v835 = vstv %s834
        %v836 = vmul.f32 %v391, %v835
        %838 = vrot.lane.b32.xlu0 %v836, 48
        %v839 = vpop.permute.xlu0 %838
        %v840 = vrot.slane %v839, 7
        %v841 = vsel %vm340, %v840, %v839
        %v843 = vadd.f32 %v833, %v841
        %s844 = sld [smem:[#allocation3 + $0x5e]]
        %v845 = vstv %s844
        %v846 = vmul.f32 %v391, %v845
        %848 = vrot.lane.b32.xlu0 %v846, 32
        %v849 = vpop.permute.xlu0 %848
        %v850 = vrot.slane %v849, 7
        %v851 = vsel %vm351, %v850, %v849
        %v853 = vadd.f32 %v843, %v851
        %s854 = scalar_lea.vmem [#allocation7], 3
        %v855 = vld [vmem:[%s854] ss:$8 sm:$0x3]
        %857 = vrot.lane.b32.xlu0 %v855, 80
        %v858 = vpop.permute.xlu0 %857
        %v859 = vrot.slane %v858, 7
        %v860 = vsel %vm317, %v859, %v858
        %v862 = vmul.f32 %v853, %v860
        %864 = vrot.lane.b32.xlu0 %v862, 125
        %v865 = vpop.permute.xlu0 %864
        %v866 = vrot.slane %v865, 1
        %vm867 = vcmask 1022976
        %v868 = vsel %vm867, %v865, %v866
        %v870 = vadd.f32 %v723, %v868
        %s871 = sld [smem:[#allocation3 + $0x4]]
        %v872 = vstv %s871
        %v873 = vmul.f32 %v283, %v872
        %v874 = vadd.f32 %v873, 0.0
        %s875 = sld [smem:[#allocation3 + $0xb]]
        %v876 = vstv %s875
        %v877 = vmul.f32 %v283, %v876
        %879 = vrot.lane.b32.xlu0 %v877, 112
        %v880 = vpop.permute.xlu0 %879
        %v881 = vrot.slane %v880, 1
        %v882 = vsel %vm295, %v880, %v881
        %v884 = vadd.f32 %v874, %v882
        %s885 = sld [smem:[#allocation3 + $0x12]]
        %v886 = vstv %s885
        %v887 = vmul.f32 %v283, %v886
        %889 = vrot.lane.b32.xlu0 %v887, 96
        %v890 = vpop.permute.xlu0 %889
        %v891 = vrot.slane %v890, 1
        %v892 = vsel %vm306, %v890, %v891
        %v894 = vadd.f32 %v884, %v892
        %s895 = sld [smem:[#allocation3 + $0x19]]
        %v896 = vstv %s895
        %v897 = vmul.f32 %v321, %v896
        %899 = vrot.lane.b32.xlu0 %v897, 80
        %v900 = vpop.permute.xlu0 %899
        %v901 = vrot.slane %v900, 7
        %v902 = vsel %vm317, %v901, %v900
        %v904 = vadd.f32 %v894, %v902
        %s905 = sld [smem:[#allocation3 + $0x20]]
        %v906 = vstv %s905
        %v907 = vmul.f32 %v321, %v906
        %909 = vrot.lane.b32.xlu0 %v907, 64
        %v910 = vpop.permute.xlu0 %909
        %v911 = vrot.slane %v910, 7
        %v912 = vsel %vm329, %v911, %v910
        %v914 = vadd.f32 %v904, %v912
        %s915 = sld [smem:[#allocation3 + $0x27]]
        %v916 = vstv %s915
        %v917 = vmul.f32 %v321, %v916
        %919 = vrot.lane.b32.xlu0 %v917, 48
        %v920 = vpop.permute.xlu0 %919
        %v921 = vrot.slane %v920, 7
        %v922 = vsel %vm340, %v921, %v920
        %v924 = vadd.f32 %v914, %v922
        %s925 = sld [smem:[#allocation3 + $0x2e]]
        %v926 = vstv %s925
        %v927 = vmul.f32 %v321, %v926
        %929 = vrot.lane.b32.xlu0 %v927, 32
        %v930 = vpop.permute.xlu0 %929
        %v931 = vrot.slane %v930, 7
        %v932 = vsel %vm351, %v931, %v930
        %v934 = vadd.f32 %v924, %v932
        %s935 = sld [smem:[#allocation3 + $0x35]]
        %v936 = vstv %s935
        %v937 = vmul.f32 %v356, %v936
        %v938 = vadd.f32 %v934, %v937
        %s939 = sld [smem:[#allocation3 + $0x3c]]
        %v940 = vstv %s939
        %v941 = vmul.f32 %v356, %v940
        %943 = vrot.lane.b32.xlu0 %v941, 112
        %v944 = vpop.permute.xlu0 %943
        %v945 = vrot.slane %v944, 1
        %v946 = vsel %vm295, %v944, %v945
        %v948 = vadd.f32 %v938, %v946
        %s949 = sld [smem:[#allocation3 + $0x43]]
        %v950 = vstv %s949
        %v951 = vmul.f32 %v356, %v950
        %953 = vrot.lane.b32.xlu0 %v951, 96
        %v954 = vpop.permute.xlu0 %953
        %v955 = vrot.slane %v954, 1
        %v956 = vsel %vm306, %v954, %v955
        %v958 = vadd.f32 %v948, %v956
        %s959 = sld [smem:[#allocation3 + $0x4a]]
        %v960 = vstv %s959
        %v961 = vmul.f32 %v391, %v960
        %963 = vrot.lane.b32.xlu0 %v961, 80
        %v964 = vpop.permute.xlu0 %963
        %v965 = vrot.slane %v964, 7
        %v966 = vsel %vm317, %v965, %v964
        %v968 = vadd.f32 %v958, %v966
        %s969 = sld [smem:[#allocation3 + $0x51]]
        %v970 = vstv %s969
        %v971 = vmul.f32 %v391, %v970
        %973 = vrot.lane.b32.xlu0 %v971, 64
        %v974 = vpop.permute.xlu0 %973
        %v975 = vrot.slane %v974, 7
        %v976 = vsel %vm329, %v975, %v974
        %v978 = vadd.f32 %v968, %v976
        %s979 = sld [smem:[#allocation3 + $0x58]]
        %v980 = vstv %s979
        %v981 = vmul.f32 %v391, %v980
        %983 = vrot.lane.b32.xlu0 %v981, 48
        %v984 = vpop.permute.xlu0 %983
        %v985 = vrot.slane %v984, 7
        %v986 = vsel %vm340, %v985, %v984
        %v988 = vadd.f32 %v978, %v986
        %s989 = sld [smem:[#allocation3 + $0x5f]]
        %v990 = vstv %s989
        %v991 = vmul.f32 %v391, %v990
        %993 = vrot.lane.b32.xlu0 %v991, 32
        %v994 = vpop.permute.xlu0 %993
        %v995 = vrot.slane %v994, 7
        %v996 = vsel %vm351, %v995, %v994
        %v998 = vadd.f32 %v988, %v996
        %s999 = scalar_lea.vmem [#allocation7], 4
        %v1000 = vld [vmem:[%s999] ss:$8 sm:$0x3]
        %1002 = vrot.lane.b32.xlu0 %v1000, 81
        %v1003 = vpop.permute.xlu0 %1002
        %v1004 = vrot.slane %v1003, 7
        %vm1005 = vcmask 662528
        %v1006 = vsel %vm1005, %v1004, %v1003
        %v1008 = vmul.f32 %v998, %v1006
        %1010 = vrot.lane.b32.xlu0 %v1008, 124
        %v1011 = vpop.permute.xlu0 %1010
        %v1012 = vrot.slane %v1011, 1
        %vm1013 = vcmask 1014784
        %v1014 = vsel %vm1013, %v1011, %v1012
        %v1016 = vadd.f32 %v870, %v1014
        %s1017 = sld [smem:[#allocation3 + $0x5]]
        %v1018 = vstv %s1017
        %v1019 = vmul.f32 %v283, %v1018
        %v1020 = vadd.f32 %v1019, 0.0
        %s1021 = sld [smem:[#allocation3 + $0xc]]
        %v1022 = vstv %s1021
        %v1023 = vmul.f32 %v283, %v1022
        %1025 = vrot.lane.b32.xlu0 %v1023, 112
        %v1026 = vpop.permute.xlu0 %1025
        %v1027 = vrot.slane %v1026, 1
        %v1028 = vsel %vm295, %v1026, %v1027
        %v1030 = vadd.f32 %v1020, %v1028
        %s1031 = sld [smem:[#allocation3 + $0x13]]
        %v1032 = vstv %s1031
        %v1033 = vmul.f32 %v283, %v1032
        %1035 = vrot.lane.b32.xlu0 %v1033, 96
        %v1036 = vpop.permute.xlu0 %1035
        %v1037 = vrot.slane %v1036, 1
        %v1038 = vsel %vm306, %v1036, %v1037
        %v1040 = vadd.f32 %v1030, %v1038
        %s1041 = sld [smem:[#allocation3 + $0x1a]]
        %v1042 = vstv %s1041
        %v1043 = vmul.f32 %v321, %v1042
        %1045 = vrot.lane.b32.xlu0 %v1043, 80
        %v1046 = vpop.permute.xlu0 %1045
        %v1047 = vrot.slane %v1046, 7
        %v1048 = vsel %vm317, %v1047, %v1046
        %v1050 = vadd.f32 %v1040, %v1048
        %s1051 = sld [smem:[#allocation3 + $0x21]]
        %v1052 = vstv %s1051
        %v1053 = vmul.f32 %v321, %v1052
        %1055 = vrot.lane.b32.xlu0 %v1053, 64
        %v1056 = vpop.permute.xlu0 %1055
        %v1057 = vrot.slane %v1056, 7
        %v1058 = vsel %vm329, %v1057, %v1056
        %v1060 = vadd.f32 %v1050, %v1058
        %s1061 = sld [smem:[#allocation3 + $0x28]]
        %v1062 = vstv %s1061
        %v1063 = vmul.f32 %v321, %v1062
        %1065 = vrot.lane.b32.xlu0 %v1063, 48
        %v1066 = vpop.permute.xlu0 %1065
        %v1067 = vrot.slane %v1066, 7
        %v1068 = vsel %vm340, %v1067, %v1066
        %v1070 = vadd.f32 %v1060, %v1068
        %s1071 = sld [smem:[#allocation3 + $0x2f]]
        %v1072 = vstv %s1071
        %v1073 = vmul.f32 %v321, %v1072
        %1075 = vrot.lane.b32.xlu0 %v1073, 32
        %v1076 = vpop.permute.xlu0 %1075
        %v1077 = vrot.slane %v1076, 7
        %v1078 = vsel %vm351, %v1077, %v1076
        %v1080 = vadd.f32 %v1070, %v1078
        %s1081 = sld [smem:[#allocation3 + $0x36]]
        %v1082 = vstv %s1081
        %v1083 = vmul.f32 %v356, %v1082
        %v1084 = vadd.f32 %v1080, %v1083
        %s1085 = sld [smem:[#allocation3 + $0x3d]]
        %v1086 = vstv %s1085
        %v1087 = vmul.f32 %v356, %v1086
        %1089 = vrot.lane.b32.xlu0 %v1087, 112
        %v1090 = vpop.permute.xlu0 %1089
        %v1091 = vrot.slane %v1090, 1
        %v1092 = vsel %vm295, %v1090, %v1091
        %v1094 = vadd.f32 %v1084, %v1092
        %s1095 = sld [smem:[#allocation3 + $0x44]]
        %v1096 = vstv %s1095
        %v1097 = vmul.f32 %v356, %v1096
        %1099 = vrot.lane.b32.xlu0 %v1097, 96
        %v1100 = vpop.permute.xlu0 %1099
        %v1101 = vrot.slane %v1100, 1
        %v1102 = vsel %vm306, %v1100, %v1101
        %v1104 = vadd.f32 %v1094, %v1102
        %s1105 = sld [smem:[#allocation3 + $0x4b]]
        %v1106 = vstv %s1105
        %v1107 = vmul.f32 %v391, %v1106
        %1109 = vrot.lane.b32.xlu0 %v1107, 80
        %v1110 = vpop.permute.xlu0 %1109
        %v1111 = vrot.slane %v1110, 7
        %v1112 = vsel %vm317, %v1111, %v1110
        %v1114 = vadd.f32 %v1104, %v1112
        %s1115 = sld [smem:[#allocation3 + $0x52]]
        %v1116 = vstv %s1115
        %v1117 = vmul.f32 %v391, %v1116
        %1119 = vrot.lane.b32.xlu0 %v1117, 64
        %v1120 = vpop.permute.xlu0 %1119
        %v1121 = vrot.slane %v1120, 7
        %v1122 = vsel %vm329, %v1121, %v1120
        %v1124 = vadd.f32 %v1114, %v1122
        %s1125 = sld [smem:[#allocation3 + $0x59]]
        %v1126 = vstv %s1125
        %v1127 = vmul.f32 %v391, %v1126
        %1129 = vrot.lane.b32.xlu0 %v1127, 48
        %v1130 = vpop.permute.xlu0 %1129
        %v1131 = vrot.slane %v1130, 7
        %v1132 = vsel %vm340, %v1131, %v1130
        %v1134 = vadd.f32 %v1124, %v1132
        %s1135 = sld [smem:[#allocation3 + $0x60]]
        %v1136 = vstv %s1135
        %v1137 = vmul.f32 %v391, %v1136
        %1139 = vrot.lane.b32.xlu0 %v1137, 32
        %v1140 = vpop.permute.xlu0 %1139
        %v1141 = vrot.slane %v1140, 7
        %v1142 = vsel %vm351, %v1141, %v1140
        %v1144 = vadd.f32 %v1134, %v1142
        %s1145 = scalar_lea.vmem [#allocation7], 5
        %v1146 = vld [vmem:[%s1145] ss:$8 sm:$0x3]
        %1148 = vrot.lane.b32.xlu0 %v1146, 82
        %v1149 = vpop.permute.xlu0 %1148
        %v1150 = vrot.slane %v1149, 7
        %vm1151 = vcmask 670720
        %v1152 = vsel %vm1151, %v1150, %v1149
        %v1154 = vmul.f32 %v1144, %v1152
        %1156 = vrot.lane.b32.xlu0 %v1154, 123
        %v1157 = vpop.permute.xlu0 %1156
        %v1158 = vrot.slane %v1157, 1
        %vm1159 = vcmask 1006592
        %v1160 = vsel %vm1159, %v1157, %v1158
        %v1162 = vadd.f32 %v1016, %v1160
        %s1163 = sld [smem:[#allocation3 + $0x6]]
        %v1164 = vstv %s1163
        %v1165 = vmul.f32 %v283, %v1164
        %v1166 = vadd.f32 %v1165, 0.0
        %s1167 = sld [smem:[#allocation3 + $0xd]]
        %v1168 = vstv %s1167
        %v1169 = vmul.f32 %v283, %v1168
        %1171 = vrot.lane.b32.xlu0 %v1169, 112
        %v1172 = vpop.permute.xlu0 %1171
        %v1173 = vrot.slane %v1172, 1
        %v1174 = vsel %vm295, %v1172, %v1173
        %v1176 = vadd.f32 %v1166, %v1174
        %s1177 = sld [smem:[#allocation3 + $0x14]]
        %v1178 = vstv %s1177
        %v1179 = vmul.f32 %v283, %v1178
        %1181 = vrot.lane.b32.xlu0 %v1179, 96
        %v1182 = vpop.permute.xlu0 %1181
        %v1183 = vrot.slane %v1182, 1
        %v1184 = vsel %vm306, %v1182, %v1183
        %v1186 = vadd.f32 %v1176, %v1184
        %s1187 = sld [smem:[#allocation3 + $0x1b]]
        %v1188 = vstv %s1187
        %v1189 = vmul.f32 %v321, %v1188
        %1191 = vrot.lane.b32.xlu0 %v1189, 80
        %v1192 = vpop.permute.xlu0 %1191
        %v1193 = vrot.slane %v1192, 7
        %v1194 = vsel %vm317, %v1193, %v1192
        %v1196 = vadd.f32 %v1186, %v1194
        %s1197 = sld [smem:[#allocation3 + $0x22]]
        %v1198 = vstv %s1197
        %v1199 = vmul.f32 %v321, %v1198
        %1201 = vrot.lane.b32.xlu0 %v1199, 64
        %v1202 = vpop.permute.xlu0 %1201
        %v1203 = vrot.slane %v1202, 7
        %v1204 = vsel %vm329, %v1203, %v1202
        %v1206 = vadd.f32 %v1196, %v1204
        %s1207 = sld [smem:[#allocation3 + $0x29]]
        %v1208 = vstv %s1207
        %v1209 = vmul.f32 %v321, %v1208
        %1211 = vrot.lane.b32.xlu0 %v1209, 48
        %v1212 = vpop.permute.xlu0 %1211
        %v1213 = vrot.slane %v1212, 7
        %v1214 = vsel %vm340, %v1213, %v1212
        %v1216 = vadd.f32 %v1206, %v1214
        %s1217 = sld [smem:[#allocation3 + $0x30]]
        %v1218 = vstv %s1217
        %v1219 = vmul.f32 %v321, %v1218
        %1221 = vrot.lane.b32.xlu0 %v1219, 32
        %v1222 = vpop.permute.xlu0 %1221
        %v1223 = vrot.slane %v1222, 7
        %v1224 = vsel %vm351, %v1223, %v1222
        %v1226 = vadd.f32 %v1216, %v1224
        %s1227 = sld [smem:[#allocation3 + $0x37]]
        %v1228 = vstv %s1227
        %v1229 = vmul.f32 %v356, %v1228
        %v1230 = vadd.f32 %v1226, %v1229
        %s1231 = sld [smem:[#allocation3 + $0x3e]]
        %v1232 = vstv %s1231
        %v1233 = vmul.f32 %v356, %v1232
        %1235 = vrot.lane.b32.xlu0 %v1233, 112
        %v1236 = vpop.permute.xlu0 %1235
        %v1237 = vrot.slane %v1236, 1
        %v1238 = vsel %vm295, %v1236, %v1237
        %v1240 = vadd.f32 %v1230, %v1238
        %s1241 = sld [smem:[#allocation3 + $0x45]]
        %v1242 = vstv %s1241
        %v1243 = vmul.f32 %v356, %v1242
        %1245 = vrot.lane.b32.xlu0 %v1243, 96
        %v1246 = vpop.permute.xlu0 %1245
        %v1247 = vrot.slane %v1246, 1
        %v1248 = vsel %vm306, %v1246, %v1247
        %v1250 = vadd.f32 %v1240, %v1248
        %s1251 = sld [smem:[#allocation3 + $0x4c]]
        %v1252 = vstv %s1251
        %v1253 = vmul.f32 %v391, %v1252
        %1255 = vrot.lane.b32.xlu0 %v1253, 80
        %v1256 = vpop.permute.xlu0 %1255
        %v1257 = vrot.slane %v1256, 7
        %v1258 = vsel %vm317, %v1257, %v1256
        %v1260 = vadd.f32 %v1250, %v1258
        %s1261 = sld [smem:[#allocation3 + $0x53]]
        %v1262 = vstv %s1261
        %v1263 = vmul.f32 %v391, %v1262
        %1265 = vrot.lane.b32.xlu0 %v1263, 64
        %v1266 = vpop.permute.xlu0 %1265
        %v1267 = vrot.slane %v1266, 7
        %v1268 = vsel %vm329, %v1267, %v1266
        %v1270 = vadd.f32 %v1260, %v1268
        %s1271 = sld [smem:[#allocation3 + $0x5a]]
        %v1272 = vstv %s1271
        %v1273 = vmul.f32 %v391, %v1272
        %1275 = vrot.lane.b32.xlu0 %v1273, 48
        %v1276 = vpop.permute.xlu0 %1275
        %v1277 = vrot.slane %v1276, 7
        %v1278 = vsel %vm340, %v1277, %v1276
        %v1280 = vadd.f32 %v1270, %v1278
        %s1281 = sld [smem:[#allocation3 + $0x61]]
        %v1282 = vstv %s1281
        %v1283 = vmul.f32 %v391, %v1282
        %1285 = vrot.lane.b32.xlu0 %v1283, 32
        %v1286 = vpop.permute.xlu0 %1285
        %v1287 = vrot.slane %v1286, 7
        %v1288 = vsel %vm351, %v1287, %v1286
        %v1290 = vadd.f32 %v1280, %v1288
        %s1291 = scalar_lea.vmem [#allocation7], 6
        %v1292 = vld [vmem:[%s1291] ss:$8 sm:$0x3]
        %1294 = vrot.lane.b32.xlu0 %v1292, 83
        %v1295 = vpop.permute.xlu0 %1294
        %v1296 = vrot.slane %v1295, 7
        %vm1297 = vcmask 678912
        %v1298 = vsel %vm1297, %v1296, %v1295
        %v1300 = vmul.f32 %v1290, %v1298
        %1302 = vrot.lane.b32.xlu0 %v1300, 122
        %v1303 = vpop.permute.xlu0 %1302
        %v1304 = vrot.slane %v1303, 1
        %vm1305 = vcmask 998400
        %v1306 = vsel %vm1305, %v1303, %v1304
        %v1308 = vadd.f32 %v1162, %v1306
        %v1309 = vxor.u32 %v1308, 2147483648
        %v1310 = vmul.f32 %v1309, 1.442695
        %v1311 = vpow.pop %v1310
        %v1312 = vadd.f32 %v1311, 1.0
        %v1313 = vrcp.pop %v1312
        %v1314 = vmul.f32 %v1312, %v1313
        %v1315 = vsub.f32 1.0, %v1314
        %v1316 = vmul.f32 %v1313, %v1315
        %v1317 = vadd.f32 %v1313, %v1316
        %vm1318 = vweird.f32 %v1312
        %vm1319 = vweird.f32 %v1313
        %vm1320 = vmor %vm1318, %vm1319
        %v1321 = vsel %vm1320, %v1313, %v1317
        %v1322 = vand.u32 2147483647, %v1312
        %vm1323 = vcmp.eq.f32.partialorder %v1322, 8.507059e+37
        %v1324 = vand.u32 %v1312, 2147483648
        %v1325 = vor.u32 1.1754944e-38, %v1324
        %v1326 = vsel %vm1323, %v1325, %v1321
        %v1327 = vmul.f32 1.0, %v1326
        %v1329 = vperm.slane %v1327, 0
        %v1330 = vperm.slane %v1327, 1
        %v1331 = vperm.slane %v1327, 2
        %s1332 = smul.u32 0, 2
        %s1333 = smul.addr %s1332, 4
        %s1334 = scalar_lea.vmem %s193, %s1333 [#allocation8]
        %v1335 = vld [vmem:[%s1334] sm:$0xff]
        %v1336 = vrot.slane %v1330, 4
        %v1337 = vsel %vm228, %v1329, %v1336
        %1338 = vrot.lane.b32.xlu0 %v1337, 51
        %v1339 = vpop.permute.xlu0 %1338
        %1340 = vrot.lane.b32.xlu0 %v1331, 51
        %v1341 = vpop.permute.xlu0 %1340
        %v1342 = vrot.slane %v1339, 4
        %v1343 = vrot.slane %v1341, 4
        %v1344 = vsel %vm228, %v1342, %v1343
        %vm1345 = vcmask 416768
        %v1346 = vsel %vm1345, %v1339, %v1344
        %v1348 = vmul.f32 %v1335, %v1346
        %s1349 = smul.addr %s1332, 4
        %s1350 = scalar_lea.vmem %s217, %s1349 [#allocation10]
        %1351 = vst [vmem:[%s1350] sm:$0xff] %v1348
        %s1352 = sand.u32 %s98, 1
        %s1353 = scalar_lea.sflag [#allocation5], %s1352
        %s1354 = sand.u32 %s98, 1
        %s1355 = smul.addr %s1354, 8
        %s1356 = scalar_lea.vmem [#allocation10], %s1355
        // Predicated region
        $region45: #{tpu_custom_call.1} parent=31 // pred_check
          %p1357 = pneg %p108
        $region46: #{tpu_custom_call.1} parent=31 // pred_check_branch
          %1359 = sbr.rel (%p1357) target = $region48
        $region47: #{tpu_custom_call.1} parent=31 // pred_region
          %1361 = vsyncadd %s1353, 0
          %s1362 = smul.addr %s22, 2
          %s1363 = smul.addr %s1362, 4
          %s1364 = scalar_lea.hbm %s3, %s1363
          %s1366 = sshll.u32 %s1356, 4
          %s1367 = int_to_ptr.vmem [resolvable:$true] %s1366
          %s1368 = sshll.u32 %s1364, 4
          %s1369 = int_to_ptr.hbm [resolvable:$true] %s1368
          %1371 = dma.vmem_to_hbm [thread:$0]  %s1367, 128, %s1369, %s1353
        $region48: #{tpu_custom_call.1} parent=31 // pred_fallthru
          _
      $region32: #{tpu_custom_call.1} parent=5 // pred_fallthru
        _
      %p1372 = scmp.le.s32.totalorder 2, %s17
      // Predicated region
      $region49: #{tpu_custom_call.1} parent=5 // pred_check
        %p1373 = pneg %p1372
      $region50: #{tpu_custom_call.1} parent=5 // pred_check_branch
        %1375 = sbr.rel (%p1373) target = $region52
      $region51: #{tpu_custom_call.1} parent=5 // pred_region
        %s1376 = ssub.s32 %s17, 2
        // Predicated region
        $region53: #{tpu_custom_call.1} parent=51 // pred_check
          %p1377 = pneg %p114
        $region54: #{tpu_custom_call.1} parent=51 // pred_check_branch
          %1379 = sbr.rel (%p1377) target = $region56
        $region55: #{tpu_custom_call.1} parent=51 // pred_region
          %s1380 = sand.u32 %s99, 1
          %s1381 = scalar_lea.sflag [#allocation5], %s1380
          %s1382 = sand.u32 %s99, 1
          %s1383 = smul.addr %s1382, 8
          %s1384 = scalar_lea.vmem [#allocation10], %s1383
          %1386 = dma.done %s1381, 128
        $region56: #{tpu_custom_call.1} parent=51 // pred_fallthru
          _
      $region52: #{tpu_custom_call.1} parent=5 // pred_fallthru
        _
    $region6: #{tpu_custom_call.1} parent=1 // loop_footer
      %s21 = sadd.s32 1, %s17
    $region7: #{tpu_custom_call.1} parent=1 // loop_footer_branch
      %16 = sbr.rel target = $region3
    $region8: #{tpu_custom_call.1} parent=1 // loop_exit
      _
    %1387 = vsyncpa [#allocation4], 1
    %s1388 = scalar_lea.sflag [#allocation4], 1
    %1389 = vsyncpa %s1388, 1
    %1390 = vsyncpa [#allocation9], 1
    %s1391 = scalar_lea.sflag [#allocation9], 1
    %1392 = vsyncpa %s1391, 1
    %1393 = vsyncpa [#allocation5], 1
    %s1394 = scalar_lea.sflag [#allocation5], 1
    %1395 = vsyncpa %s1394, 1
    %1396 = vsyncpa [#allocation6], 1
    %s1397 = scalar_lea.sflag [#allocation6], 1
    %1398 = vsyncpa %s1397, 1

</llo_original>
